<compile_context>
chip_gen: v5e
topology: v5e:2x2
jax: 0.10.0
libtpu: 0.0.40
codegen_flags: <defaults>
</compile_context>

<pallas_src>
import functools

import jax
import jax.numpy as jnp
from jax.experimental import pallas as pl
from jax.experimental.pallas import tpu as pltpu

_LANE = 128


def _round_up(x, m):
    return ((x + m - 1) // m) * m


def _sepconv_kernel(x_ref, dw_ref, pw_ref, bias_ref, o_ref, xpad_ref, *,
                    kh_size, kw_size, dilation, padding,
                    b_tile, h_in, w_in, h_out, w_out, cp_in, cp_out):
    """Fused depthwise conv (BN-folded) + pointwise conv for B_TILE images.

    x_ref    : (B_TILE, H, W, Cp)        unpadded input block (VMEM)
    dw_ref   : (KH*KW, Cp)               depthwise weights * BN scale
    pw_ref   : (Cp, Op)                  pointwise (1x1 conv) weights (Cin, Cout)
    bias_ref : (1, Op)                   folded BN shift pushed through pw
    o_ref    : (B_TILE*H_out*W_out, Op)  lane-dense output slab
    xpad_ref : (B_TILE, Hp, Wp, Cp)      VMEM scratch, spatially zero-padded
    """
    # In-kernel spatial zero-padding (avoids a wrapper-side HBM pad pass).
    if padding > 0:
        xpad_ref[...] = jnp.zeros_like(xpad_ref)
        xpad_ref[:, padding:padding + h_in, padding:padding + w_in, :] = (
            x_ref[...].astype(xpad_ref.dtype))
    else:
        xpad_ref[...] = x_ref[...].astype(xpad_ref.dtype)

    # Depthwise conv (BN scale already folded into dw): shifted slices of the
    # padded block, scaled per-channel and accumulated (VPU work, lane-dense).
    # Taps loaded/reshaped once, outside the static tap loop.
    dw_taps = dw_ref[...].reshape(kh_size * kw_size, 1, 1, cp_in)
    acc = jnp.zeros((b_tile, h_out, w_out, cp_in), jnp.float32)
    for kh in range(kh_size):
        for kw in range(kw_size):
            tap = xpad_ref[:,
                           kh * dilation: kh * dilation + h_out,
                           kw * dilation: kw * dilation + w_out,
                           :]
            acc = acc + tap * dw_taps[kh * kw_size + kw]

    # Pointwise 1x1 conv == matmul over channels (MXU): (B*H*W, Cp) @ (Cp, Op).
    y = jnp.dot(acc.reshape(b_tile * h_out * w_out, cp_in), pw_ref[...],
                preferred_element_type=jnp.float32)
    y = y + bias_ref[...]          # folded BN shift propagated through pw
    o_ref[...] = y.astype(o_ref.dtype)


def separable_conv2d(x_nchw, dw_weight, bn_gamma, bn_beta, bn_mean, bn_var,
                     pw_weight, *, stride=1, padding=0, dilation=1, eps=1e-5,
                     batch_tile=2):
    """Pallas SeparableConv2d forward.

    x_nchw   : (N, C, H, W)     -- PyTorch layout
    dw_weight: (C, 1, KH, KW)   -- depthwise conv weight (groups=C)
    pw_weight: (O, C, 1, 1)     -- pointwise conv weight
    Returns  : (N, O, H_out, W_out)
    """
    assert stride == 1, "only stride=1 implemented"  # TODO(synk): stride > 1
    n, c_in, h, w = x_nchw.shape
    c_out = pw_weight.shape[0]
    kh_size, kw_size = dw_weight.shape[2], dw_weight.shape[3]
    h_out = h + 2 * padding - dilation * (kh_size - 1)
    w_out = w + 2 * padding - dilation * (kw_size - 1)
    hp, wp = h + 2 * padding, w + 2 * padding

    # Lane-dense channel padding (both Cin and Cout up to a 128 multiple).
    cp_in = _round_up(c_in, _LANE)
    cp_out = _round_up(c_out, _LANE)

    b_tile = batch_tile if (n % batch_tile == 0) else 1

    # --- wrapper glue (plain JAX, one-time): layout + parameter folding -----
    x_nhwc = jnp.transpose(x_nchw, (0, 2, 3, 1))                    # (N,H,W,C)
    x_p = jnp.pad(x_nhwc, ((0, 0), (0, 0), (0, 0), (0, cp_in - c_in)))

    # Fold BatchNorm2d (eval mode) into the weights:
    #   bn(y) = y*scale + shift  =>  dw' = dw*scale ; bias = shift @ pw
    scale = bn_gamma / jnp.sqrt(bn_var + eps)                       # (C,)
    shift = bn_beta - bn_mean * scale                               # (C,)
    dw = jnp.transpose(dw_weight[:, 0, :, :], (1, 2, 0)).reshape(
        kh_size * kw_size, c_in) * scale[None, :]                   # (KH*KW,C)
    pw = jnp.transpose(pw_weight[:, :, 0, 0], (1, 0))               # (C, O)
    bias = shift @ pw                                               # (O,)

    dw_p = jnp.pad(dw, ((0, 0), (0, cp_in - c_in)))
    pw_p = jnp.pad(pw, ((0, cp_in - c_in), (0, cp_out - c_out)))
    bias_p = jnp.pad(bias, (0, cp_out - c_out)).reshape(1, cp_out)

    kernel = functools.partial(
        _sepconv_kernel,
        kh_size=kh_size, kw_size=kw_size, dilation=dilation, padding=padding,
        b_tile=b_tile, h_in=h, w_in=w, h_out=h_out, w_out=w_out,
        cp_in=cp_in, cp_out=cp_out)

    out = pl.pallas_call(
        kernel,
        out_shape=jax.ShapeDtypeStruct((n * h_out * w_out, cp_out),
                                       x_nchw.dtype),
        grid_spec=pltpu.PrefetchScalarGridSpec(
            num_scalar_prefetch=0,
            grid=(n // b_tile,),
            in_specs=[
                pl.BlockSpec((b_tile, h, w, cp_in), lambda b: (b, 0, 0, 0)),
                pl.BlockSpec((kh_size * kw_size, cp_in), lambda b: (0, 0)),
                pl.BlockSpec((cp_in, cp_out), lambda b: (0, 0)),
                pl.BlockSpec((1, cp_out), lambda b: (0, 0)),
            ],
            out_specs=pl.BlockSpec((b_tile * h_out * w_out, cp_out),
                                   lambda b: (b, 0)),
            scratch_shapes=[pltpu.VMEM((b_tile, hp, wp, cp_in), jnp.float32)],
        ),
        compiler_params=pltpu.CompilerParams(
            dimension_semantics=("parallel",),
            vmem_limit_bytes=64 << 20),
    )(x_p, dw_p, pw_p, bias_p)

    # Un-pack the lane-dense slab: slice off channel padding, back to NCHW.
    out = out.reshape(n, h_out, w_out, cp_out)[..., :c_out]
    return jnp.transpose(out, (0, 3, 1, 2))


def _reference(x, dw_weight, bn_gamma, bn_beta, bn_mean, bn_var, pw_weight,
               *, padding, dilation, eps=1e-5):
    """Pure-JAX reference (lax conv) for correctness checking."""
    c_in = x.shape[1]
    y = jax.lax.conv_general_dilated(
        x, dw_weight, window_strides=(1, 1),
        padding=((padding, padding), (padding, padding)),
        rhs_dilation=(dilation, dilation),
        dimension_numbers=("NCHW", "OIHW", "NCHW"),
        feature_group_count=c_in)
    scale = bn_gamma / jnp.sqrt(bn_var + eps)
    y = y * scale[None, :, None, None] + (
        bn_beta - bn_mean * scale)[None, :, None, None]
    y = jax.lax.conv_general_dilated(
        y, pw_weight, window_strides=(1, 1), padding="VALID",
        dimension_numbers=("NCHW", "OIHW", "NCHW"))
    return y


if __name__ == "__main__":
    # Small, deterministic config: SeparableConv2d(in=4, out=8, k=3, pad=1)
    N, C_IN, H, W = 2, 4, 16, 16
    C_OUT, K, PAD, DIL = 8, 3, 1, 1

    key = jax.random.PRNGKey(0)
    k_x, k_dw, k_pw, k_g, k_b = jax.random.split(key, 5)

    x = jax.random.normal(k_x, (N, C_IN, H, W), jnp.float32)
    dw_weight = jax.random.normal(k_dw, (C_IN, 1, K, K), jnp.float32) * 0.1
    pw_weight = jax.random.normal(k_pw, (C_OUT, C_IN, 1, 1), jnp.float32) * 0.1
    # BatchNorm2d parameters (eval mode).
    # TODO(synk): BN is evaluated with running statistics (eval mode); a fresh
    # PyTorch module in train mode would use per-batch statistics instead.
    bn_gamma = 1.0 + 0.1 * jax.random.normal(k_g, (C_IN,), jnp.float32)
    bn_beta = 0.1 * jax.random.normal(k_b, (C_IN,), jnp.float32)
    bn_mean = jnp.zeros((C_IN,), jnp.float32)
    bn_var = jnp.ones((C_IN,), jnp.float32)

    out = separable_conv2d(x, dw_weight, bn_gamma, bn_beta, bn_mean, bn_var,
                           pw_weight, stride=1, padding=PAD, dilation=DIL)
    out = jax.block_until_ready(out)

    ref = _reference(x, dw_weight, bn_gamma, bn_beta, bn_mean, bn_var,
                     pw_weight, padding=PAD, dilation=DIL)
    assert out.shape == (N, C_OUT, H, W), out.shape
    assert jnp.allclose(out, ref, atol=1e-4, rtol=1e-4), \
        float(jnp.max(jnp.abs(out - ref)))

    print("KERNEL_OK")
</pallas_src>

<mosaic_0001>
module attributes {stable_mosaic.version = 11 : i64} {
  func.func @_sepconv_kernel(%arg0: i32, %arg1: memref<2x16x16x128xf32, #tpu.memory_space<vmem>>, %arg2: memref<9x128xf32, #tpu.memory_space<vmem>>, %arg3: memref<128x128xf32, #tpu.memory_space<vmem>>, %arg4: memref<1x128xf32, #tpu.memory_space<vmem>>, %arg5: memref<512x128xf32, #tpu.memory_space<vmem>>, %arg6: memref<2x18x18x128xf32, #tpu.memory_space<vmem>>) attributes {dimension_semantics = [#tpu.dimension_semantics<parallel>], iteration_bounds = array<i64: 1>, scalar_prefetch = 0 : i64, scratch_operands = 1 : i64, tpu.core_type = #tpu.core_type<tc>, window_params = [{transform_indices = @transform_0, window_bounds = array<i64: 2, 16, 16, 128>}, {pipeline_mode = #tpu.pipeline_mode<synchronous>, transform_indices = @transform_1, window_bounds = array<i64: 9, 128>}, {pipeline_mode = #tpu.pipeline_mode<synchronous>, transform_indices = @transform_2, window_bounds = array<i64: 128, 128>}, {pipeline_mode = #tpu.pipeline_mode<synchronous>, transform_indices = @transform_3, window_bounds = array<i64: 1, 128>}, {transform_indices = @transform_4, window_bounds = array<i64: 512, 128>}]} {
    %cst = arith.constant 0.000000e+00 : f32
    %0 = vector.broadcast %cst : f32 to vector<2x18x18x128xf32>
    %c0 = arith.constant 0 : index
    %c0_0 = arith.constant 0 : index
    %c0_1 = arith.constant 0 : index
    %c0_2 = arith.constant 0 : index
    %1 = vector.load %arg6[%c0, %c0_0, %c0_1, %c0_2] : memref<2x18x18x128xf32, #tpu.memory_space<vmem>>, vector<2x18x18x128xf32>
    tpu.vector_store %arg6[%c0, %c0_0, %c0_1, %c0_2], %0 {strides = array<i32>} : memref<2x18x18x128xf32, #tpu.memory_space<vmem>>, vector<2x18x18x128xf32>,
    %c0_3 = arith.constant 0 : index
    %c0_4 = arith.constant 0 : index
    %c0_5 = arith.constant 0 : index
    %c0_6 = arith.constant 0 : index
    %2 = vector.load %arg1[%c0_3, %c0_4, %c0_5, %c0_6] : memref<2x16x16x128xf32, #tpu.memory_space<vmem>>, vector<2x16x16x128xf32>
    %c0_7 = arith.constant 0 : index
    %c1 = arith.constant 1 : index
    %c1_8 = arith.constant 1 : index
    %c0_9 = arith.constant 0 : index
    %3 = vector.load %arg6[%c0_7, %c1, %c1_8, %c0_9] : memref<2x18x18x128xf32, #tpu.memory_space<vmem>>, vector<2x16x16x128xf32>
    tpu.vector_store %arg6[%c0_7, %c1, %c1_8, %c0_9], %2 {strides = array<i32>} : memref<2x18x18x128xf32, #tpu.memory_space<vmem>>, vector<2x16x16x128xf32>,
    %c0_10 = arith.constant 0 : index
    %c0_11 = arith.constant 0 : index
    %4 = vector.load %arg2[%c0_10, %c0_11] : memref<9x128xf32, #tpu.memory_space<vmem>>, vector<9x128xf32>
    %5 = vector.shape_cast %4 : vector<9x128xf32> to vector<9x1x1x128xf32>
    %cst_12 = arith.constant 0.000000e+00 : f32
    %6 = vector.broadcast %cst_12 : f32 to vector<2x16x16x128xf32>
    %c0_13 = arith.constant 0 : index
    %c0_14 = arith.constant 0 : index
    %c0_15 = arith.constant 0 : index
    %c0_16 = arith.constant 0 : index
    %7 = vector.load %arg6[%c0_13, %c0_14, %c0_15, %c0_16] : memref<2x18x18x128xf32, #tpu.memory_space<vmem>>, vector<2x16x16x128xf32>
    %8 = vector.extract_strided_slice %5 {offsets = [0, 0, 0, 0], sizes = [1, 1, 1, 128], strides = [1, 1, 1, 1]} : vector<9x1x1x128xf32> to vector<1x1x1x128xf32>
    %9 = vector.shape_cast %8 : vector<1x1x1x128xf32> to vector<1x1x128xf32>
    %10 = vector.shape_cast %9 : vector<1x1x128xf32> to vector<1x1x1x128xf32>
    %11 = vector.broadcast %10 : vector<1x1x1x128xf32> to vector<2x16x16x128xf32>
    %12 = arith.mulf %7, %11 : vector<2x16x16x128xf32>
    %13 = arith.addf %6, %12 : vector<2x16x16x128xf32>
    %c0_17 = arith.constant 0 : index
    %c0_18 = arith.constant 0 : index
    %c1_19 = arith.constant 1 : index
    %c0_20 = arith.constant 0 : index
    %14 = vector.load %arg6[%c0_17, %c0_18, %c1_19, %c0_20] : memref<2x18x18x128xf32, #tpu.memory_space<vmem>>, vector<2x16x16x128xf32>
    %15 = vector.extract_strided_slice %5 {offsets = [1, 0, 0, 0], sizes = [1, 1, 1, 128], strides = [1, 1, 1, 1]} : vector<9x1x1x128xf32> to vector<1x1x1x128xf32>
    %16 = vector.shape_cast %15 : vector<1x1x1x128xf32> to vector<1x1x128xf32>
    %17 = vector.shape_cast %16 : vector<1x1x128xf32> to vector<1x1x1x128xf32>
    %18 = vector.broadcast %17 : vector<1x1x1x128xf32> to vector<2x16x16x128xf32>
    %19 = arith.mulf %14, %18 : vector<2x16x16x128xf32>
    %20 = arith.addf %13, %19 : vector<2x16x16x128xf32>
    %c0_21 = arith.constant 0 : index
    %c0_22 = arith.constant 0 : index
    %c2 = arith.constant 2 : index
    %c0_23 = arith.constant 0 : index
    %21 = vector.load %arg6[%c0_21, %c0_22, %c2, %c0_23] : memref<2x18x18x128xf32, #tpu.memory_space<vmem>>, vector<2x16x16x128xf32>
    %22 = vector.extract_strided_slice %5 {offsets = [2, 0, 0, 0], sizes = [1, 1, 1, 128], strides = [1, 1, 1, 1]} : vector<9x1x1x128xf32> to vector<1x1x1x128xf32>
    %23 = vector.shape_cast %22 : vector<1x1x1x128xf32> to vector<1x1x128xf32>
    %24 = vector.shape_cast %23 : vector<1x1x128xf32> to vector<1x1x1x128xf32>
    %25 = vector.broadcast %24 : vector<1x1x1x128xf32> to vector<2x16x16x128xf32>
    %26 = arith.mulf %21, %25 : vector<2x16x16x128xf32>
    %27 = arith.addf %20, %26 : vector<2x16x16x128xf32>
    %c0_24 = arith.constant 0 : index
    %c1_25 = arith.constant 1 : index
    %c0_26 = arith.constant 0 : index
    %c0_27 = arith.constant 0 : index
    %28 = vector.load %arg6[%c0_24, %c1_25, %c0_26, %c0_27] : memref<2x18x18x128xf32, #tpu.memory_space<vmem>>, vector<2x16x16x128xf32>
    %29 = vector.extract_strided_slice %5 {offsets = [3, 0, 0, 0], sizes = [1, 1, 1, 128], strides = [1, 1, 1, 1]} : vector<9x1x1x128xf32> to vector<1x1x1x128xf32>
    %30 = vector.shape_cast %29 : vector<1x1x1x128xf32> to vector<1x1x128xf32>
    %31 = vector.shape_cast %30 : vector<1x1x128xf32> to vector<1x1x1x128xf32>
    %32 = vector.broadcast %31 : vector<1x1x1x128xf32> to vector<2x16x16x128xf32>
    %33 = arith.mulf %28, %32 : vector<2x16x16x128xf32>
    %34 = arith.addf %27, %33 : vector<2x16x16x128xf32>
    %c0_28 = arith.constant 0 : index
    %c1_29 = arith.constant 1 : index
    %c1_30 = arith.constant 1 : index
    %c0_31 = arith.constant 0 : index
    %35 = vector.load %arg6[%c0_28, %c1_29, %c1_30, %c0_31] : memref<2x18x18x128xf32, #tpu.memory_space<vmem>>, vector<2x16x16x128xf32>
    %36 = vector.extract_strided_slice %5 {offsets = [4, 0, 0, 0], sizes = [1, 1, 1, 128], strides = [1, 1, 1, 1]} : vector<9x1x1x128xf32> to vector<1x1x1x128xf32>
    %37 = vector.shape_cast %36 : vector<1x1x1x128xf32> to vector<1x1x128xf32>
    %38 = vector.shape_cast %37 : vector<1x1x128xf32> to vector<1x1x1x128xf32>
    %39 = vector.broadcast %38 : vector<1x1x1x128xf32> to vector<2x16x16x128xf32>
    %40 = arith.mulf %35, %39 : vector<2x16x16x128xf32>
    %41 = arith.addf %34, %40 : vector<2x16x16x128xf32>
    %c0_32 = arith.constant 0 : index
    %c1_33 = arith.constant 1 : index
    %c2_34 = arith.constant 2 : index
    %c0_35 = arith.constant 0 : index
    %42 = vector.load %arg6[%c0_32, %c1_33, %c2_34, %c0_35] : memref<2x18x18x128xf32, #tpu.memory_space<vmem>>, vector<2x16x16x128xf32>
    %43 = vector.extract_strided_slice %5 {offsets = [5, 0, 0, 0], sizes = [1, 1, 1, 128], strides = [1, 1, 1, 1]} : vector<9x1x1x128xf32> to vector<1x1x1x128xf32>
    %44 = vector.shape_cast %43 : vector<1x1x1x128xf32> to vector<1x1x128xf32>
    %45 = vector.shape_cast %44 : vector<1x1x128xf32> to vector<1x1x1x128xf32>
    %46 = vector.broadcast %45 : vector<1x1x1x128xf32> to vector<2x16x16x128xf32>
    %47 = arith.mulf %42, %46 : vector<2x16x16x128xf32>
    %48 = arith.addf %41, %47 : vector<2x16x16x128xf32>
    %c0_36 = arith.constant 0 : index
    %c2_37 = arith.constant 2 : index
    %c0_38 = arith.constant 0 : index
    %c0_39 = arith.constant 0 : index
    %49 = vector.load %arg6[%c0_36, %c2_37, %c0_38, %c0_39] : memref<2x18x18x128xf32, #tpu.memory_space<vmem>>, vector<2x16x16x128xf32>
    %50 = vector.extract_strided_slice %5 {offsets = [6, 0, 0, 0], sizes = [1, 1, 1, 128], strides = [1, 1, 1, 1]} : vector<9x1x1x128xf32> to vector<1x1x1x128xf32>
    %51 = vector.shape_cast %50 : vector<1x1x1x128xf32> to vector<1x1x128xf32>
    %52 = vector.shape_cast %51 : vector<1x1x128xf32> to vector<1x1x1x128xf32>
    %53 = vector.broadcast %52 : vector<1x1x1x128xf32> to vector<2x16x16x128xf32>
    %54 = arith.mulf %49, %53 : vector<2x16x16x128xf32>
    %55 = arith.addf %48, %54 : vector<2x16x16x128xf32>
    %c0_40 = arith.constant 0 : index
    %c2_41 = arith.constant 2 : index
    %c1_42 = arith.constant 1 : index
    %c0_43 = arith.constant 0 : index
    %56 = vector.load %arg6[%c0_40, %c2_41, %c1_42, %c0_43] : memref<2x18x18x128xf32, #tpu.memory_space<vmem>>, vector<2x16x16x128xf32>
    %57 = vector.extract_strided_slice %5 {offsets = [7, 0, 0, 0], sizes = [1, 1, 1, 128], strides = [1, 1, 1, 1]} : vector<9x1x1x128xf32> to vector<1x1x1x128xf32>
    %58 = vector.shape_cast %57 : vector<1x1x1x128xf32> to vector<1x1x128xf32>
    %59 = vector.shape_cast %58 : vector<1x1x128xf32> to vector<1x1x1x128xf32>
    %60 = vector.broadcast %59 : vector<1x1x1x128xf32> to vector<2x16x16x128xf32>
    %61 = arith.mulf %56, %60 : vector<2x16x16x128xf32>
    %62 = arith.addf %55, %61 : vector<2x16x16x128xf32>
    %c0_44 = arith.constant 0 : index
    %c2_45 = arith.constant 2 : index
    %c2_46 = arith.constant 2 : index
    %c0_47 = arith.constant 0 : index
    %63 = vector.load %arg6[%c0_44, %c2_45, %c2_46, %c0_47] : memref<2x18x18x128xf32, #tpu.memory_space<vmem>>, vector<2x16x16x128xf32>
    %64 = vector.extract_strided_slice %5 {offsets = [8, 0, 0, 0], sizes = [1, 1, 1, 128], strides = [1, 1, 1, 1]} : vector<9x1x1x128xf32> to vector<1x1x1x128xf32>
    %65 = vector.shape_cast %64 : vector<1x1x1x128xf32> to vector<1x1x128xf32>
    %66 = vector.shape_cast %65 : vector<1x1x128xf32> to vector<1x1x1x128xf32>
    %67 = vector.broadcast %66 : vector<1x1x1x128xf32> to vector<2x16x16x128xf32>
    %68 = arith.mulf %63, %67 : vector<2x16x16x128xf32>
    %69 = arith.addf %62, %68 : vector<2x16x16x128xf32>
    %70 = vector.shape_cast %69 : vector<2x16x16x128xf32> to vector<512x128xf32>
    %c0_48 = arith.constant 0 : index
    %c0_49 = arith.constant 0 : index
    %71 = vector.load %arg3[%c0_48, %c0_49] : memref<128x128xf32, #tpu.memory_space<vmem>>, vector<128x128xf32>
    %cst_50 = arith.constant dense<0.000000e+00> : vector<512x128xf32>
    %72 = tpu.matmul %70, %71, %cst_50 {dimension_numbers = #tpu.dot_dimension_numbers<[1], [0], [0], [1], [0, 0, 1, 1], [], []>} : vector<512x128xf32>, vector<128x128xf32>, vector<512x128xf32> -> vector<512x128xf32>
    %c0_51 = arith.constant 0 : index
    %c0_52 = arith.constant 0 : index
    %73 = vector.load %arg4[%c0_51, %c0_52] : memref<1x128xf32, #tpu.memory_space<vmem>>, vector<1x128xf32>
    %74 = vector.broadcast %73 : vector<1x128xf32> to vector<512x128xf32>
    %75 = arith.addf %72, %74 : vector<512x128xf32>
    %c0_53 = arith.constant 0 : index
    %c0_54 = arith.constant 0 : index
    %76 = vector.load %arg5[%c0_53, %c0_54] : memref<512x128xf32, #tpu.memory_space<vmem>>, vector<512x128xf32>
    tpu.vector_store %arg5[%c0_53, %c0_54], %75 {strides = array<i32>} : memref<512x128xf32, #tpu.memory_space<vmem>>, vector<512x128xf32>,
    return
  }
  func.func @transform_0(%arg0: i32) -> (i32, i32, i32, i32) {
    %c0_i32 = arith.constant 0 : i32
    %c0_i32_0 = arith.constant 0 : i32
    %c0_i32_1 = arith.constant 0 : i32
    %c0_i32_2 = arith.constant 0 : i32
    return %arg0, %c0_i32, %c0_i32_0, %c0_i32_1 : i32, i32, i32, i32
  }
  func.func @transform_1(%arg0: i32) -> (i32, i32) {
    %c0_i32 = arith.constant 0 : i32
    %c0_i32_0 = arith.constant 0 : i32
    %c0_i32_1 = arith.constant 0 : i32
    return %c0_i32, %c0_i32_0 : i32, i32
  }
  func.func @transform_2(%arg0: i32) -> (i32, i32) {
    %c0_i32 = arith.constant 0 : i32
    %c0_i32_0 = arith.constant 0 : i32
    %c0_i32_1 = arith.constant 0 : i32
    return %c0_i32, %c0_i32_0 : i32, i32
  }
  func.func @transform_3(%arg0: i32) -> (i32, i32) {
    %c0_i32 = arith.constant 0 : i32
    %c0_i32_0 = arith.constant 0 : i32
    %c0_i32_1 = arith.constant 0 : i32
    return %c0_i32, %c0_i32_0 : i32, i32
  }
  func.func @transform_4(%arg0: i32) -> (i32, i32) {
    %c0_i32 = arith.constant 0 : i32
    %c0_i32_0 = arith.constant 0 : i32
    return %arg0, %c0_i32 : i32, i32
  }
}

</mosaic_0001>

<llo_original>
// kernel: tpu_custom_call.1
$region0: #{tpu_custom_call.1}
  #allocation0 [shape = 'u32[]', space=smem, size = 0x4, offset = 0x4, fixed_abs, tag = 'smem constant byte address 0x4 - core index']
  #allocation1 [shape = 'u32[72,128]{1,0:T(1,128)}', space=vmem, size = 0x9000, scoped, tag = 'internal scratch']
  #allocation2 [shape = 'f32[2,18,18,128]{3,2,1,0:T(8,128)}', space=vmem, size = 0x6c000, scoped, tag = 'scratch operand']
  %s0 = inlined_call_operand.hbm [shape: f32[2,16,16,128], index: 0, kind: input, shape index: {}]
  %s1 = inlined_call_operand.hbm [shape: f32[9,128], index: 1, kind: input, shape index: {}]
  %s2 = inlined_call_operand.hbm [shape: f32[128,128], index: 2, kind: input, shape index: {}]
  %s3 = inlined_call_operand.vmem [shape: f32[1,128], index: 3, kind: input, shape index: {}]
  %s4 = inlined_call_operand.hbm [shape: f32[512,128], index: 4, kind: output, shape index: {}]
  %s5 = sld [smem:[#allocation0]]
  $region38: #{tpu_custom_call.1} parent=0
    _
  %s7 = ssub.s32 1, %s5
  %s8 = scalar_select 0, %s7, %s5
  $region1: #{tpu_custom_call.1} parent=0
    #allocation3 [shape = 'u8[262144]{0}', space=vmem, size = 0x40000, scoped, tag = 'input window, operand 0, single buffered']
    #allocation4 [shape = 's32[1]{0}', space=sflag, size = 0x4, scoped, tag = 'scoped memory for tpu_custom_call.1']
    #allocation5 [shape = 's32[1]{0}', space=sflag, size = 0x4, scoped, tag = 'scoped memory for tpu_custom_call.1']
    #allocation6 [shape = 'u8[8192]{0}', space=vmem, size = 0x2000, scoped, tag = 'input window, operand 1, single buffered']
    #allocation7 [shape = 's32[1]{0}', space=sflag, size = 0x4, scoped, tag = 'scoped memory for tpu_custom_call.1']
    #allocation8 [shape = 'u8[65536]{0}', space=vmem, size = 0x10000, scoped, tag = 'input window, operand 2, single buffered']
    #allocation9 [shape = 'u8[262144]{0}', space=vmem, size = 0x40000, scoped, tag = 'output window, operand 0, single buffered']
    %9 = vsyncpa [#allocation4], 0
    %10 = vsyncpa [#allocation7], 0
    %11 = vsyncpa [#allocation5], 0
    // Predicated region
    $region2: #{tpu_custom_call.1} parent=1 // pred_check
      _
    $region3: #{tpu_custom_call.1} parent=1 // pred_check_branch
      %13 = sbr.rel (0) target = $region5
    $region4: #{tpu_custom_call.1} parent=1 // pred_region
      %15 = vsyncadd [#allocation4], 0
      %s16 = sshll.u32 %s0, 4
      %s17 = int_to_ptr.hbm [resolvable:$true] %s16
      %s18 = sshll.u32 [#allocation3], 4
      %s19 = int_to_ptr.vmem [resolvable:$true] %s18
      %24 = dma.hbm_to_vmem [thread:$0]  %s17, 8192, %s19, [#allocation4], 128, 128, 8
    $region5: #{tpu_custom_call.1} parent=1 // pred_fallthru
      _
    // Predicated region
    $region6: #{tpu_custom_call.1} parent=1 // pred_check
      _
    $region7: #{tpu_custom_call.1} parent=1 // pred_check_branch
      %26 = sbr.rel (0) target = $region9
    $region8: #{tpu_custom_call.1} parent=1 // pred_region
      %28 = vsyncadd [#allocation7], 0
      %s29 = sshll.u32 %s1, 4
      %s30 = int_to_ptr.hbm [resolvable:$true] %s29
      %s31 = sshll.u32 [#allocation6], 4
      %s32 = int_to_ptr.vmem [resolvable:$true] %s31
      %37 = dma.hbm_to_vmem [thread:$0]  %s30, 256, %s32, [#allocation7], 128, 128, 8
    $region9: #{tpu_custom_call.1} parent=1 // pred_fallthru
      _
    // Predicated region
    $region10: #{tpu_custom_call.1} parent=1 // pred_check
      _
    $region11: #{tpu_custom_call.1} parent=1 // pred_check_branch
      %39 = sbr.rel (0) target = $region13
    $region12: #{tpu_custom_call.1} parent=1 // pred_region
      %41 = vsyncadd [#allocation7], 0
      %s42 = sshll.u32 %s2, 4
      %s43 = int_to_ptr.hbm [resolvable:$true] %s42
      %s44 = sshll.u32 [#allocation8], 4
      %s45 = int_to_ptr.vmem [resolvable:$true] %s44
      %50 = dma.hbm_to_vmem [thread:$0]  %s43, 2048, %s45, [#allocation7], 128, 128, 8
    $region13: #{tpu_custom_call.1} parent=1 // pred_fallthru
      _
    // Predicated region
    $region14: #{tpu_custom_call.1} parent=1 // pred_check
      _
    $region15: #{tpu_custom_call.1} parent=1 // pred_check_branch
      %52 = sbr.rel (0) target = $region17
    $region16: #{tpu_custom_call.1} parent=1 // pred_region
      _
    $region17: #{tpu_custom_call.1} parent=1 // pred_fallthru
      _
    // Predicated region
    $region18: #{tpu_custom_call.1} parent=1 // pred_check
      _
    $region19: #{tpu_custom_call.1} parent=1 // pred_check_branch
      %54 = sbr.rel (0) target = $region21
    $region20: #{tpu_custom_call.1} parent=1 // pred_region
      %56 = dma.done [#allocation4], 8192
    $region21: #{tpu_custom_call.1} parent=1 // pred_fallthru
      _
    // Predicated region
    $region22: #{tpu_custom_call.1} parent=1 // pred_check
      _
    $region23: #{tpu_custom_call.1} parent=1 // pred_check_branch
      %58 = sbr.rel (0) target = $region25
    $region24: #{tpu_custom_call.1} parent=1 // pred_region
      %60 = dma.done [#allocation7], 256
    $region25: #{tpu_custom_call.1} parent=1 // pred_fallthru
      _
    // Predicated region
    $region26: #{tpu_custom_call.1} parent=1 // pred_check
      _
    $region27: #{tpu_custom_call.1} parent=1 // pred_check_branch
      %62 = sbr.rel (0) target = $region29
    $region28: #{tpu_custom_call.1} parent=1 // pred_region
      %64 = dma.done [#allocation7], 2048
    $region29: #{tpu_custom_call.1} parent=1 // pred_fallthru
      _
    %65 = vst [vmem:[#allocation2] sm:$0xff] 0.0
    %66 = vst [vmem:[#allocation2 + $0x8] sm:$0xff] 0.0
    %67 = vst [vmem:[#allocation2 + $0x10] sm:$0x3] 0.0
    %68 = vst [vmem:[#allocation2 + $0x18] sm:$0xff] 0.0
    %69 = vst [vmem:[#allocation2 + $0x20] sm:$0xff] 0.0
    %70 = vst [vmem:[#allocation2 + $0x28] sm:$0x3] 0.0
    %71 = vst [vmem:[#allocation2 + $0x30] sm:$0xff] 0.0
    %72 = vst [vmem:[#allocation2 + $0x38] sm:$0xff] 0.0
    %73 = vst [vmem:[#allocation2 + $0x40] sm:$0x3] 0.0
    %74 = vst [vmem:[#allocation2 + $0x48] sm:$0xff] 0.0
    %75 = vst [vmem:[#allocation2 + $0x50] sm:$0xff] 0.0
    %76 = vst [vmem:[#allocation2 + $0x58] sm:$0x3] 0.0
    %77 = vst [vmem:[#allocation2 + $0x60] sm:$0xff] 0.0
    %78 = vst [vmem:[#allocation2 + $0x68] sm:$0xff] 0.0
    %79 = vst [vmem:[#allocation2 + $0x70] sm:$0x3] 0.0
    %80 = vst [vmem:[#allocation2 + $0x78] sm:$0xff] 0.0
    %81 = vst [vmem:[#allocation2 + $0x80] sm:$0xff] 0.0
    %82 = vst [vmem:[#allocation2 + $0x88] sm:$0x3] 0.0
    %83 = vst [vmem:[#allocation2 + $0x90] sm:$0xff] 0.0
    %84 = vst [vmem:[#allocation2 + $0x98] sm:$0xff] 0.0
    %85 = vst [vmem:[#allocation2 + $0xa0] sm:$0x3] 0.0
    %86 = vst [vmem:[#allocation2 + $0xa8] sm:$0xff] 0.0
    %87 = vst [vmem:[#allocation2 + $0xb0] sm:$0xff] 0.0
    %88 = vst [vmem:[#allocation2 + $0xb8] sm:$0x3] 0.0
    %89 = vst [vmem:[#allocation2 + $0xc0] sm:$0xff] 0.0
    %90 = vst [vmem:[#allocation2 + $0xc8] sm:$0xff] 0.0
    %91 = vst [vmem:[#allocation2 + $0xd0] sm:$0x3] 0.0
    %92 = vst [vmem:[#allocation2 + $0xd8] sm:$0xff] 0.0
    %93 = vst [vmem:[#allocation2 + $0xe0] sm:$0xff] 0.0
    %94 = vst [vmem:[#allocation2 + $0xe8] sm:$0x3] 0.0
    %95 = vst [vmem:[#allocation2 + $0xf0] sm:$0xff] 0.0
    %96 = vst [vmem:[#allocation2 + $0xf8] sm:$0xff] 0.0
    %97 = vst [vmem:[#allocation2 + $0x100] sm:$0x3] 0.0
    %98 = vst [vmem:[#allocation2 + $0x108] sm:$0xff] 0.0
    %99 = vst [vmem:[#allocation2 + $0x110] sm:$0xff] 0.0
    %100 = vst [vmem:[#allocation2 + $0x118] sm:$0x3] 0.0
    %101 = vst [vmem:[#allocation2 + $0x120] sm:$0xff] 0.0
    %102 = vst [vmem:[#allocation2 + $0x128] sm:$0xff] 0.0
    %103 = vst [vmem:[#allocation2 + $0x130] sm:$0x3] 0.0
    %104 = vst [vmem:[#allocation2 + $0x138] sm:$0xff] 0.0
    %105 = vst [vmem:[#allocation2 + $0x140] sm:$0xff] 0.0
    %106 = vst [vmem:[#allocation2 + $0x148] sm:$0x3] 0.0
    %107 = vst [vmem:[#allocation2 + $0x150] sm:$0xff] 0.0
    %108 = vst [vmem:[#allocation2 + $0x158] sm:$0xff] 0.0
    %109 = vst [vmem:[#allocation2 + $0x160] sm:$0x3] 0.0
    %110 = vst [vmem:[#allocation2 + $0x168] sm:$0xff] 0.0
    %111 = vst [vmem:[#allocation2 + $0x170] sm:$0xff] 0.0
    %112 = vst [vmem:[#allocation2 + $0x178] sm:$0x3] 0.0
    %113 = vst [vmem:[#allocation2 + $0x180] sm:$0xff] 0.0
    %114 = vst [vmem:[#allocation2 + $0x188] sm:$0xff] 0.0
    %115 = vst [vmem:[#allocation2 + $0x190] sm:$0x3] 0.0
    %116 = vst [vmem:[#allocation2 + $0x198] sm:$0xff] 0.0
    %117 = vst [vmem:[#allocation2 + $0x1a0] sm:$0xff] 0.0
    %118 = vst [vmem:[#allocation2 + $0x1a8] sm:$0x3] 0.0
    %119 = vst [vmem:[#allocation2 + $0x1b0] sm:$0xff] 0.0
    %120 = vst [vmem:[#allocation2 + $0x1b8] sm:$0xff] 0.0
    %121 = vst [vmem:[#allocation2 + $0x1c0] sm:$0x3] 0.0
    %122 = vst [vmem:[#allocation2 + $0x1c8] sm:$0xff] 0.0
    %123 = vst [vmem:[#allocation2 + $0x1d0] sm:$0xff] 0.0
    %124 = vst [vmem:[#allocation2 + $0x1d8] sm:$0x3] 0.0
    %125 = vst [vmem:[#allocation2 + $0x1e0] sm:$0xff] 0.0
    %126 = vst [vmem:[#allocation2 + $0x1e8] sm:$0xff] 0.0
    %127 = vst [vmem:[#allocation2 + $0x1f0] sm:$0x3] 0.0
    %128 = vst [vmem:[#allocation2 + $0x1f8] sm:$0xff] 0.0
    %129 = vst [vmem:[#allocation2 + $0x200] sm:$0xff] 0.0
    %130 = vst [vmem:[#allocation2 + $0x208] sm:$0x3] 0.0
    %131 = vst [vmem:[#allocation2 + $0x210] sm:$0xff] 0.0
    %132 = vst [vmem:[#allocation2 + $0x218] sm:$0xff] 0.0
    %133 = vst [vmem:[#allocation2 + $0x220] sm:$0x3] 0.0
    %134 = vst [vmem:[#allocation2 + $0x228] sm:$0xff] 0.0
    %135 = vst [vmem:[#allocation2 + $0x230] sm:$0xff] 0.0
    %136 = vst [vmem:[#allocation2 + $0x238] sm:$0x3] 0.0
    %137 = vst [vmem:[#allocation2 + $0x240] sm:$0xff] 0.0
    %138 = vst [vmem:[#allocation2 + $0x248] sm:$0xff] 0.0
    %139 = vst [vmem:[#allocation2 + $0x250] sm:$0x3] 0.0
    %140 = vst [vmem:[#allocation2 + $0x258] sm:$0xff] 0.0
    %141 = vst [vmem:[#allocation2 + $0x260] sm:$0xff] 0.0
    %142 = vst [vmem:[#allocation2 + $0x268] sm:$0x3] 0.0
    %143 = vst [vmem:[#allocation2 + $0x270] sm:$0xff] 0.0
    %144 = vst [vmem:[#allocation2 + $0x278] sm:$0xff] 0.0
    %145 = vst [vmem:[#allocation2 + $0x280] sm:$0x3] 0.0
    %146 = vst [vmem:[#allocation2 + $0x288] sm:$0xff] 0.0
    %147 = vst [vmem:[#allocation2 + $0x290] sm:$0xff] 0.0
    %148 = vst [vmem:[#allocation2 + $0x298] sm:$0x3] 0.0
    %149 = vst [vmem:[#allocation2 + $0x2a0] sm:$0xff] 0.0
    %150 = vst [vmem:[#allocation2 + $0x2a8] sm:$0xff] 0.0
    %151 = vst [vmem:[#allocation2 + $0x2b0] sm:$0x3] 0.0
    %152 = vst [vmem:[#allocation2 + $0x2b8] sm:$0xff] 0.0
    %153 = vst [vmem:[#allocation2 + $0x2c0] sm:$0xff] 0.0
    %154 = vst [vmem:[#allocation2 + $0x2c8] sm:$0x3] 0.0
    %155 = vst [vmem:[#allocation2 + $0x2d0] sm:$0xff] 0.0
    %156 = vst [vmem:[#allocation2 + $0x2d8] sm:$0xff] 0.0
    %157 = vst [vmem:[#allocation2 + $0x2e0] sm:$0x3] 0.0
    %158 = vst [vmem:[#allocation2 + $0x2e8] sm:$0xff] 0.0
    %159 = vst [vmem:[#allocation2 + $0x2f0] sm:$0xff] 0.0
    %160 = vst [vmem:[#allocation2 + $0x2f8] sm:$0x3] 0.0
    %161 = vst [vmem:[#allocation2 + $0x300] sm:$0xff] 0.0
    %162 = vst [vmem:[#allocation2 + $0x308] sm:$0xff] 0.0
    %163 = vst [vmem:[#allocation2 + $0x310] sm:$0x3] 0.0
    %164 = vst [vmem:[#allocation2 + $0x318] sm:$0xff] 0.0
    %165 = vst [vmem:[#allocation2 + $0x320] sm:$0xff] 0.0
    %166 = vst [vmem:[#allocation2 + $0x328] sm:$0x3] 0.0
    %167 = vst [vmem:[#allocation2 + $0x330] sm:$0xff] 0.0
    %168 = vst [vmem:[#allocation2 + $0x338] sm:$0xff] 0.0
    %169 = vst [vmem:[#allocation2 + $0x340] sm:$0x3] 0.0
    %170 = vst [vmem:[#allocation2 + $0x348] sm:$0xff] 0.0
    %171 = vst [vmem:[#allocation2 + $0x350] sm:$0xff] 0.0
    %172 = vst [vmem:[#allocation2 + $0x358] sm:$0x3] 0.0
    %v173 = vld [vmem:[#allocation3] sm:$0xff]
    %v174 = vld [vmem:[#allocation3 + $0x8] sm:$0xff]
    %v175 = vld [vmem:[#allocation3 + $0x10] sm:$0xff]
    %v176 = vld [vmem:[#allocation3 + $0x18] sm:$0xff]
    %v177 = vld [vmem:[#allocation3 + $0x20] sm:$0xff]
    %v178 = vld [vmem:[#allocation3 + $0x28] sm:$0xff]
    %v179 = vld [vmem:[#allocation3 + $0x30] sm:$0xff]
    %v180 = vld [vmem:[#allocation3 + $0x38] sm:$0xff]
    %v181 = vld [vmem:[#allocation3 + $0x40] sm:$0xff]
    %v182 = vld [vmem:[#allocation3 + $0x48] sm:$0xff]
    %v183 = vld [vmem:[#allocation3 + $0x50] sm:$0xff]
    %v184 = vld [vmem:[#allocation3 + $0x58] sm:$0xff]
    %v185 = vld [vmem:[#allocation3 + $0x60] sm:$0xff]
    %v186 = vld [vmem:[#allocation3 + $0x68] sm:$0xff]
    %v187 = vld [vmem:[#allocation3 + $0x70] sm:$0xff]
    %v188 = vld [vmem:[#allocation3 + $0x78] sm:$0xff]
    %v189 = vld [vmem:[#allocation3 + $0x80] sm:$0xff]
    %v190 = vld [vmem:[#allocation3 + $0x88] sm:$0xff]
    %v191 = vld [vmem:[#allocation3 + $0x90] sm:$0xff]
    %v192 = vld [vmem:[#allocation3 + $0x98] sm:$0xff]
    %v193 = vld [vmem:[#allocation3 + $0xa0] sm:$0xff]
    %v194 = vld [vmem:[#allocation3 + $0xa8] sm:$0xff]
    %v195 = vld [vmem:[#allocation3 + $0xb0] sm:$0xff]
    %v196 = vld [vmem:[#allocation3 + $0xb8] sm:$0xff]
    %v197 = vld [vmem:[#allocation3 + $0xc0] sm:$0xff]
    %v198 = vld [vmem:[#allocation3 + $0xc8] sm:$0xff]
    %v199 = vld [vmem:[#allocation3 + $0xd0] sm:$0xff]
    %v200 = vld [vmem:[#allocation3 + $0xd8] sm:$0xff]
    %v201 = vld [vmem:[#allocation3 + $0xe0] sm:$0xff]
    %v202 = vld [vmem:[#allocation3 + $0xe8] sm:$0xff]
    %v203 = vld [vmem:[#allocation3 + $0xf0] sm:$0xff]
    %v204 = vld [vmem:[#allocation3 + $0xf8] sm:$0xff]
    %v205 = vld [vmem:[#allocation3 + $0x100] sm:$0xff]
    %v206 = vld [vmem:[#allocation3 + $0x108] sm:$0xff]
    %v207 = vld [vmem:[#allocation3 + $0x110] sm:$0xff]
    %v208 = vld [vmem:[#allocation3 + $0x118] sm:$0xff]
    %v209 = vld [vmem:[#allocation3 + $0x120] sm:$0xff]
    %v210 = vld [vmem:[#allocation3 + $0x128] sm:$0xff]
    %v211 = vld [vmem:[#allocation3 + $0x130] sm:$0xff]
    %v212 = vld [vmem:[#allocation3 + $0x138] sm:$0xff]
    %v213 = vld [vmem:[#allocation3 + $0x140] sm:$0xff]
    %v214 = vld [vmem:[#allocation3 + $0x148] sm:$0xff]
    %v215 = vld [vmem:[#allocation3 + $0x150] sm:$0xff]
    %v216 = vld [vmem:[#allocation3 + $0x158] sm:$0xff]
    %v217 = vld [vmem:[#allocation3 + $0x160] sm:$0xff]
    %v218 = vld [vmem:[#allocation3 + $0x168] sm:$0xff]
    %v219 = vld [vmem:[#allocation3 + $0x170] sm:$0xff]
    %v220 = vld [vmem:[#allocation3 + $0x178] sm:$0xff]
    %v221 = vld [vmem:[#allocation3 + $0x180] sm:$0xff]
    %v222 = vld [vmem:[#allocation3 + $0x188] sm:$0xff]
    %v223 = vld [vmem:[#allocation3 + $0x190] sm:$0xff]
    %v224 = vld [vmem:[#allocation3 + $0x198] sm:$0xff]
    %v225 = vld [vmem:[#allocation3 + $0x1a0] sm:$0xff]
    %v226 = vld [vmem:[#allocation3 + $0x1a8] sm:$0xff]
    %v227 = vld [vmem:[#allocation3 + $0x1b0] sm:$0xff]
    %v228 = vld [vmem:[#allocation3 + $0x1b8] sm:$0xff]
    %v229 = vld [vmem:[#allocation3 + $0x1c0] sm:$0xff]
    %v230 = vld [vmem:[#allocation3 + $0x1c8] sm:$0xff]
    %v231 = vld [vmem:[#allocation3 + $0x1d0] sm:$0xff]
    %v232 = vld [vmem:[#allocation3 + $0x1d8] sm:$0xff]
    %v233 = vld [vmem:[#allocation3 + $0x1e0] sm:$0xff]
    %v234 = vld [vmem:[#allocation3 + $0x1e8] sm:$0xff]
    %v235 = vld [vmem:[#allocation3 + $0x1f0] sm:$0xff]
    %v236 = vld [vmem:[#allocation3 + $0x1f8] sm:$0xff]
    %s237 = scalar_lea.vmem [#allocation2], 24
    %238 = vst [vmem:[%s237 + $0x1] sm:$0xff] %v173
    %239 = vst [vmem:[%s237 + $0x9] sm:$0xff] %v174
    %240 = vst [vmem:[%s237 + $0x19] sm:$0xff] %v175
    %241 = vst [vmem:[%s237 + $0x21] sm:$0xff] %v176
    %242 = vst [vmem:[%s237 + $0x31] sm:$0xff] %v177
    %243 = vst [vmem:[%s237 + $0x39] sm:$0xff] %v178
    %244 = vst [vmem:[%s237 + $0x49] sm:$0xff] %v179
    %245 = vst [vmem:[%s237 + $0x51] sm:$0xff] %v180
    %246 = vst [vmem:[%s237 + $0x61] sm:$0xff] %v181
    %247 = vst [vmem:[%s237 + $0x69] sm:$0xff] %v182
    %248 = vst [vmem:[%s237 + $0x79] sm:$0xff] %v183
    %249 = vst [vmem:[%s237 + $0x81] sm:$0xff] %v184
    %250 = vst [vmem:[%s237 + $0x91] sm:$0xff] %v185
    %251 = vst [vmem:[%s237 + $0x99] sm:$0xff] %v186
    %252 = vst [vmem:[%s237 + $0xa9] sm:$0xff] %v187
    %253 = vst [vmem:[%s237 + $0xb1] sm:$0xff] %v188
    %254 = vst [vmem:[%s237 + $0xc1] sm:$0xff] %v189
    %255 = vst [vmem:[%s237 + $0xc9] sm:$0xff] %v190
    %256 = vst [vmem:[%s237 + $0xd9] sm:$0xff] %v191
    %257 = vst [vmem:[%s237 + $0xe1] sm:$0xff] %v192
    %258 = vst [vmem:[%s237 + $0xf1] sm:$0xff] %v193
    %259 = vst [vmem:[%s237 + $0xf9] sm:$0xff] %v194
    %260 = vst [vmem:[%s237 + $0x109] sm:$0xff] %v195
    %261 = vst [vmem:[%s237 + $0x111] sm:$0xff] %v196
    %262 = vst [vmem:[%s237 + $0x121] sm:$0xff] %v197
    %263 = vst [vmem:[%s237 + $0x129] sm:$0xff] %v198
    %264 = vst [vmem:[%s237 + $0x139] sm:$0xff] %v199
    %265 = vst [vmem:[%s237 + $0x141] sm:$0xff] %v200
    %266 = vst [vmem:[%s237 + $0x151] sm:$0xff] %v201
    %267 = vst [vmem:[%s237 + $0x159] sm:$0xff] %v202
    %268 = vst [vmem:[%s237 + $0x169] sm:$0xff] %v203
    %269 = vst [vmem:[%s237 + $0x171] sm:$0xff] %v204
    %270 = vst [vmem:[%s237 + $0x1b1] sm:$0xff] %v205
    %271 = vst [vmem:[%s237 + $0x1b9] sm:$0xff] %v206
    %272 = vst [vmem:[%s237 + $0x1c9] sm:$0xff] %v207
    %273 = vst [vmem:[%s237 + $0x1d1] sm:$0xff] %v208
    %274 = vst [vmem:[%s237 + $0x1e1] sm:$0xff] %v209
    %275 = vst [vmem:[%s237 + $0x1e9] sm:$0xff] %v210
    %276 = vst [vmem:[%s237 + $0x1f9] sm:$0xff] %v211
    %277 = vst [vmem:[%s237 + $0x201] sm:$0xff] %v212
    %278 = vst [vmem:[%s237 + $0x211] sm:$0xff] %v213
    %279 = vst [vmem:[%s237 + $0x219] sm:$0xff] %v214
    %280 = vst [vmem:[%s237 + $0x229] sm:$0xff] %v215
    %281 = vst [vmem:[%s237 + $0x231] sm:$0xff] %v216
    %282 = vst [vmem:[%s237 + $0x241] sm:$0xff] %v217
    %283 = vst [vmem:[%s237 + $0x249] sm:$0xff] %v218
    %284 = vst [vmem:[%s237 + $0x259] sm:$0xff] %v219
    %285 = vst [vmem:[%s237 + $0x261] sm:$0xff] %v220
    %286 = vst [vmem:[%s237 + $0x271] sm:$0xff] %v221
    %287 = vst [vmem:[%s237 + $0x279] sm:$0xff] %v222
    %288 = vst [vmem:[%s237 + $0x289] sm:$0xff] %v223
    %289 = vst [vmem:[%s237 + $0x291] sm:$0xff] %v224
    %290 = vst [vmem:[%s237 + $0x2a1] sm:$0xff] %v225
    %291 = vst [vmem:[%s237 + $0x2a9] sm:$0xff] %v226
    %292 = vst [vmem:[%s237 + $0x2b9] sm:$0xff] %v227
    %293 = vst [vmem:[%s237 + $0x2c1] sm:$0xff] %v228
    %294 = vst [vmem:[%s237 + $0x2d1] sm:$0xff] %v229
    %295 = vst [vmem:[%s237 + $0x2d9] sm:$0xff] %v230
    %296 = vst [vmem:[%s237 + $0x2e9] sm:$0xff] %v231
    %297 = vst [vmem:[%s237 + $0x2f1] sm:$0xff] %v232
    %298 = vst [vmem:[%s237 + $0x301] sm:$0xff] %v233
    %299 = vst [vmem:[%s237 + $0x309] sm:$0xff] %v234
    %300 = vst [vmem:[%s237 + $0x319] sm:$0xff] %v235
    %301 = vst [vmem:[%s237 + $0x321] sm:$0xff] %v236
    %v302 = vld [vmem:[#allocation6] sm:$0xff]
    %v303 = vld [vmem:[#allocation6 + $0x8] sm:$0x1]
    %v304 = vld [vmem:[#allocation2] sm:$0xff]
    %v305 = vld [vmem:[#allocation2 + $0x8] sm:$0xff]
    %v306 = vld [vmem:[#allocation2 + $0x18] sm:$0xff]
    %v307 = vld [vmem:[#allocation2 + $0x20] sm:$0xff]
    %v308 = vld [vmem:[#allocation2 + $0x30] sm:$0xff]
    %v309 = vld [vmem:[#allocation2 + $0x38] sm:$0xff]
    %v310 = vld [vmem:[#allocation2 + $0x48] sm:$0xff]
    %v311 = vld [vmem:[#allocation2 + $0x50] sm:$0xff]
    %v312 = vld [vmem:[#allocation2 + $0x60] sm:$0xff]
    %v313 = vld [vmem:[#allocation2 + $0x68] sm:$0xff]
    %v314 = vld [vmem:[#allocation2 + $0x78] sm:$0xff]
    %v315 = vld [vmem:[#allocation2 + $0x80] sm:$0xff]
    %v316 = vld [vmem:[#allocation2 + $0x90] sm:$0xff]
    %v317 = vld [vmem:[#allocation2 + $0x98] sm:$0xff]
    %v318 = vld [vmem:[#allocation2 + $0xa8] sm:$0xff]
    %v319 = vld [vmem:[#allocation2 + $0xb0] sm:$0xff]
    %v320 = vld [vmem:[#allocation2 + $0xc0] sm:$0xff]
    %v321 = vld [vmem:[#allocation2 + $0xc8] sm:$0xff]
    %v322 = vld [vmem:[#allocation2 + $0xd8] sm:$0xff]
    %v323 = vld [vmem:[#allocation2 + $0xe0] sm:$0xff]
    %v324 = vld [vmem:[#allocation2 + $0xf0] sm:$0xff]
    %v325 = vld [vmem:[#allocation2 + $0xf8] sm:$0xff]
    %v326 = vld [vmem:[#allocation2 + $0x108] sm:$0xff]
    %v327 = vld [vmem:[#allocation2 + $0x110] sm:$0xff]
    %v328 = vld [vmem:[#allocation2 + $0x120] sm:$0xff]
    %v329 = vld [vmem:[#allocation2 + $0x128] sm:$0xff]
    %v330 = vld [vmem:[#allocation2 + $0x138] sm:$0xff]
    %v331 = vld [vmem:[#allocation2 + $0x140] sm:$0xff]
    %v332 = vld [vmem:[#allocation2 + $0x150] sm:$0xff]
    %v333 = vld [vmem:[#allocation2 + $0x158] sm:$0xff]
    %v334 = vld [vmem:[#allocation2 + $0x168] sm:$0xff]
    %v335 = vld [vmem:[#allocation2 + $0x170] sm:$0xff]
    %v336 = vld [vmem:[#allocation2 + $0x1b0] sm:$0xff]
    %v337 = vld [vmem:[#allocation2 + $0x1b8] sm:$0xff]
    %v338 = vld [vmem:[#allocation2 + $0x1c8] sm:$0xff]
    %v339 = vld [vmem:[#allocation2 + $0x1d0] sm:$0xff]
    %v340 = vld [vmem:[#allocation2 + $0x1e0] sm:$0xff]
    %v341 = vld [vmem:[#allocation2 + $0x1e8] sm:$0xff]
    %v342 = vld [vmem:[#allocation2 + $0x1f8] sm:$0xff]
    %v343 = vld [vmem:[#allocation2 + $0x200] sm:$0xff]
    %v344 = vld [vmem:[#allocation2 + $0x210] sm:$0xff]
    %v345 = vld [vmem:[#allocation2 + $0x218] sm:$0xff]
    %v346 = vld [vmem:[#allocation2 + $0x228] sm:$0xff]
    %v347 = vld [vmem:[#allocation2 + $0x230] sm:$0xff]
    %v348 = vld [vmem:[#allocation2 + $0x240] sm:$0xff]
    %v349 = vld [vmem:[#allocation2 + $0x248] sm:$0xff]
    %v350 = vld [vmem:[#allocation2 + $0x258] sm:$0xff]
    %v351 = vld [vmem:[#allocation2 + $0x260] sm:$0xff]
    %v352 = vld [vmem:[#allocation2 + $0x270] sm:$0xff]
    %v353 = vld [vmem:[#allocation2 + $0x278] sm:$0xff]
    %v354 = vld [vmem:[#allocation2 + $0x288] sm:$0xff]
    %v355 = vld [vmem:[#allocation2 + $0x290] sm:$0xff]
    %v356 = vld [vmem:[#allocation2 + $0x2a0] sm:$0xff]
    %v357 = vld [vmem:[#allocation2 + $0x2a8] sm:$0xff]
    %v358 = vld [vmem:[#allocation2 + $0x2b8] sm:$0xff]
    %v359 = vld [vmem:[#allocation2 + $0x2c0] sm:$0xff]
    %v360 = vld [vmem:[#allocation2 + $0x2d0] sm:$0xff]
    %v361 = vld [vmem:[#allocation2 + $0x2d8] sm:$0xff]
    %v362 = vld [vmem:[#allocation2 + $0x2e8] sm:$0xff]
    %v363 = vld [vmem:[#allocation2 + $0x2f0] sm:$0xff]
    %v364 = vld [vmem:[#allocation2 + $0x300] sm:$0xff]
    %v365 = vld [vmem:[#allocation2 + $0x308] sm:$0xff]
    %v366 = vld [vmem:[#allocation2 + $0x318] sm:$0xff]
    %v367 = vld [vmem:[#allocation2 + $0x320] sm:$0xff]
    %v368 = vperm.slane %v302, 0
    %v369 = vmul.f32 %v304, %v368
    %v370 = vmul.f32 %v305, %v368
    %v371 = vmul.f32 %v306, %v368
    %v372 = vmul.f32 %v307, %v368
    %v373 = vmul.f32 %v308, %v368
    %v374 = vmul.f32 %v309, %v368
    %v375 = vmul.f32 %v310, %v368
    %v376 = vmul.f32 %v311, %v368
    %v377 = vmul.f32 %v312, %v368
    %v378 = vmul.f32 %v313, %v368
    %v379 = vmul.f32 %v314, %v368
    %v380 = vmul.f32 %v315, %v368
    %v381 = vmul.f32 %v316, %v368
    %v382 = vmul.f32 %v317, %v368
    %v383 = vmul.f32 %v318, %v368
    %v384 = vmul.f32 %v319, %v368
    %v385 = vmul.f32 %v320, %v368
    %v386 = vmul.f32 %v321, %v368
    %v387 = vmul.f32 %v322, %v368
    %v388 = vmul.f32 %v323, %v368
    %v389 = vmul.f32 %v324, %v368
    %v390 = vmul.f32 %v325, %v368
    %v391 = vmul.f32 %v326, %v368
    %v392 = vmul.f32 %v327, %v368
    %v393 = vmul.f32 %v328, %v368
    %v394 = vmul.f32 %v329, %v368
    %v395 = vmul.f32 %v330, %v368
    %v396 = vmul.f32 %v331, %v368
    %v397 = vmul.f32 %v332, %v368
    %v398 = vmul.f32 %v333, %v368
    %v399 = vmul.f32 %v334, %v368
    %v400 = vmul.f32 %v335, %v368
    %v401 = vmul.f32 %v336, %v368
    %v402 = vmul.f32 %v337, %v368
    %v403 = vmul.f32 %v338, %v368
    %v404 = vmul.f32 %v339, %v368
    %v405 = vmul.f32 %v340, %v368
    %v406 = vmul.f32 %v341, %v368
    %v407 = vmul.f32 %v342, %v368
    %v408 = vmul.f32 %v343, %v368
    %v409 = vmul.f32 %v344, %v368
    %v410 = vmul.f32 %v345, %v368
    %v411 = vmul.f32 %v346, %v368
    %v412 = vmul.f32 %v347, %v368
    %v413 = vmul.f32 %v348, %v368
    %v414 = vmul.f32 %v349, %v368
    %v415 = vmul.f32 %v350, %v368
    %v416 = vmul.f32 %v351, %v368
    %v417 = vmul.f32 %v352, %v368
    %v418 = vmul.f32 %v353, %v368
    %v419 = vmul.f32 %v354, %v368
    %v420 = vmul.f32 %v355, %v368
    %v421 = vmul.f32 %v356, %v368
    %v422 = vmul.f32 %v357, %v368
    %v423 = vmul.f32 %v358, %v368
    %v424 = vmul.f32 %v359, %v368
    %v425 = vmul.f32 %v360, %v368
    %v426 = vmul.f32 %v361, %v368
    %v427 = vmul.f32 %v362, %v368
    %v428 = vmul.f32 %v363, %v368
    %v429 = vmul.f32 %v364, %v368
    %v430 = vmul.f32 %v365, %v368
    %v431 = vmul.f32 %v366, %v368
    %v432 = vmul.f32 %v367, %v368
    %v433 = vadd.f32 %v369, 0.0
    %v434 = vadd.f32 %v370, 0.0
    %v435 = vadd.f32 %v371, 0.0
    %v436 = vadd.f32 %v372, 0.0
    %v437 = vadd.f32 %v373, 0.0
    %v438 = vadd.f32 %v374, 0.0
    %v439 = vadd.f32 %v375, 0.0
    %v440 = vadd.f32 %v376, 0.0
    %v441 = vadd.f32 %v377, 0.0
    %v442 = vadd.f32 %v378, 0.0
    %v443 = vadd.f32 %v379, 0.0
    %v444 = vadd.f32 %v380, 0.0
    %v445 = vadd.f32 %v381, 0.0
    %v446 = vadd.f32 %v382, 0.0
    %v447 = vadd.f32 %v383, 0.0
    %v448 = vadd.f32 %v384, 0.0
    %v449 = vadd.f32 %v385, 0.0
    %v450 = vadd.f32 %v386, 0.0
    %v451 = vadd.f32 %v387, 0.0
    %v452 = vadd.f32 %v388, 0.0
    %v453 = vadd.f32 %v389, 0.0
    %v454 = vadd.f32 %v390, 0.0
    %v455 = vadd.f32 %v391, 0.0
    %v456 = vadd.f32 %v392, 0.0
    %v457 = vadd.f32 %v393, 0.0
    %v458 = vadd.f32 %v394, 0.0
    %v459 = vadd.f32 %v395, 0.0
    %v460 = vadd.f32 %v396, 0.0
    %v461 = vadd.f32 %v397, 0.0
    %v462 = vadd.f32 %v398, 0.0
    %v463 = vadd.f32 %v399, 0.0
    %v464 = vadd.f32 %v400, 0.0
    %v465 = vadd.f32 %v401, 0.0
    %v466 = vadd.f32 %v402, 0.0
    %v467 = vadd.f32 %v403, 0.0
    %v468 = vadd.f32 %v404, 0.0
    %v469 = vadd.f32 %v405, 0.0
    %v470 = vadd.f32 %v406, 0.0
    %v471 = vadd.f32 %v407, 0.0
    %v472 = vadd.f32 %v408, 0.0
    %v473 = vadd.f32 %v409, 0.0
    %v474 = vadd.f32 %v410, 0.0
    %v475 = vadd.f32 %v411, 0.0
    %v476 = vadd.f32 %v412, 0.0
    %v477 = vadd.f32 %v413, 0.0
    %v478 = vadd.f32 %v414, 0.0
    %v479 = vadd.f32 %v415, 0.0
    %v480 = vadd.f32 %v416, 0.0
    %v481 = vadd.f32 %v417, 0.0
    %v482 = vadd.f32 %v418, 0.0
    %v483 = vadd.f32 %v419, 0.0
    %v484 = vadd.f32 %v420, 0.0
    %v485 = vadd.f32 %v421, 0.0
    %v486 = vadd.f32 %v422, 0.0
    %v487 = vadd.f32 %v423, 0.0
    %v488 = vadd.f32 %v424, 0.0
    %v489 = vadd.f32 %v425, 0.0
    %v490 = vadd.f32 %v426, 0.0
    %v491 = vadd.f32 %v427, 0.0
    %v492 = vadd.f32 %v428, 0.0
    %v493 = vadd.f32 %v429, 0.0
    %v494 = vadd.f32 %v430, 0.0
    %v495 = vadd.f32 %v431, 0.0
    %v496 = vadd.f32 %v432, 0.0
    %v497 = vld [vmem:[#allocation2 + $0x1] sm:$0xff]
    %v498 = vld [vmem:[#allocation2 + $0x9] sm:$0xff]
    %v499 = vld [vmem:[#allocation2 + $0x19] sm:$0xff]
    %v500 = vld [vmem:[#allocation2 + $0x21] sm:$0xff]
    %v501 = vld [vmem:[#allocation2 + $0x31] sm:$0xff]
    %v502 = vld [vmem:[#allocation2 + $0x39] sm:$0xff]
    %v503 = vld [vmem:[#allocation2 + $0x49] sm:$0xff]
    %v504 = vld [vmem:[#allocation2 + $0x51] sm:$0xff]
    %v505 = vld [vmem:[#allocation2 + $0x61] sm:$0xff]
    %v506 = vld [vmem:[#allocation2 + $0x69] sm:$0xff]
    %v507 = vld [vmem:[#allocation2 + $0x79] sm:$0xff]
    %v508 = vld [vmem:[#allocation2 + $0x81] sm:$0xff]
    %v509 = vld [vmem:[#allocation2 + $0x91] sm:$0xff]
    %v510 = vld [vmem:[#allocation2 + $0x99] sm:$0xff]
    %v511 = vld [vmem:[#allocation2 + $0xa9] sm:$0xff]
    %v512 = vld [vmem:[#allocation2 + $0xb1] sm:$0xff]
    %v513 = vld [vmem:[#allocation2 + $0xc1] sm:$0xff]
    %v514 = vld [vmem:[#allocation2 + $0xc9] sm:$0xff]
    %v515 = vld [vmem:[#allocation2 + $0xd9] sm:$0xff]
    %v516 = vld [vmem:[#allocation2 + $0xe1] sm:$0xff]
    %v517 = vld [vmem:[#allocation2 + $0xf1] sm:$0xff]
    %v518 = vld [vmem:[#allocation2 + $0xf9] sm:$0xff]
    %v519 = vld [vmem:[#allocation2 + $0x109] sm:$0xff]
    %v520 = vld [vmem:[#allocation2 + $0x111] sm:$0xff]
    %v521 = vld [vmem:[#allocation2 + $0x121] sm:$0xff]
    %v522 = vld [vmem:[#allocation2 + $0x129] sm:$0xff]
    %v523 = vld [vmem:[#allocation2 + $0x139] sm:$0xff]
    %v524 = vld [vmem:[#allocation2 + $0x141] sm:$0xff]
    %v525 = vld [vmem:[#allocation2 + $0x151] sm:$0xff]
    %v526 = vld [vmem:[#allocation2 + $0x159] sm:$0xff]
    %v527 = vld [vmem:[#allocation2 + $0x169] sm:$0xff]
    %v528 = vld [vmem:[#allocation2 + $0x171] sm:$0xff]
    %v529 = vld [vmem:[#allocation2 + $0x1b1] sm:$0xff]
    %v530 = vld [vmem:[#allocation2 + $0x1b9] sm:$0xff]
    %v531 = vld [vmem:[#allocation2 + $0x1c9] sm:$0xff]
    %v532 = vld [vmem:[#allocation2 + $0x1d1] sm:$0xff]
    %v533 = vld [vmem:[#allocation2 + $0x1e1] sm:$0xff]
    %v534 = vld [vmem:[#allocation2 + $0x1e9] sm:$0xff]
    %v535 = vld [vmem:[#allocation2 + $0x1f9] sm:$0xff]
    %v536 = vld [vmem:[#allocation2 + $0x201] sm:$0xff]
    %v537 = vld [vmem:[#allocation2 + $0x211] sm:$0xff]
    %v538 = vld [vmem:[#allocation2 + $0x219] sm:$0xff]
    %v539 = vld [vmem:[#allocation2 + $0x229] sm:$0xff]
    %v540 = vld [vmem:[#allocation2 + $0x231] sm:$0xff]
    %v541 = vld [vmem:[#allocation2 + $0x241] sm:$0xff]
    %v542 = vld [vmem:[#allocation2 + $0x249] sm:$0xff]
    %v543 = vld [vmem:[#allocation2 + $0x259] sm:$0xff]
    %v544 = vld [vmem:[#allocation2 + $0x261] sm:$0xff]
    %v545 = vld [vmem:[#allocation2 + $0x271] sm:$0xff]
    %v546 = vld [vmem:[#allocation2 + $0x279] sm:$0xff]
    %v547 = vld [vmem:[#allocation2 + $0x289] sm:$0xff]
    %v548 = vld [vmem:[#allocation2 + $0x291] sm:$0xff]
    %v549 = vld [vmem:[#allocation2 + $0x2a1] sm:$0xff]
    %v550 = vld [vmem:[#allocation2 + $0x2a9] sm:$0xff]
    %v551 = vld [vmem:[#allocation2 + $0x2b9] sm:$0xff]
    %v552 = vld [vmem:[#allocation2 + $0x2c1] sm:$0xff]
    %v553 = vld [vmem:[#allocation2 + $0x2d1] sm:$0xff]
    %v554 = vld [vmem:[#allocation2 + $0x2d9] sm:$0xff]
    %v555 = vld [vmem:[#allocation2 + $0x2e9] sm:$0xff]
    %v556 = vld [vmem:[#allocation2 + $0x2f1] sm:$0xff]
    %v557 = vld [vmem:[#allocation2 + $0x301] sm:$0xff]
    %v558 = vld [vmem:[#allocation2 + $0x309] sm:$0xff]
    %v559 = vld [vmem:[#allocation2 + $0x319] sm:$0xff]
    %v560 = vld [vmem:[#allocation2 + $0x321] sm:$0xff]
    %v561 = vperm.slane %v302, 1
    %v562 = vmul.f32 %v497, %v561
    %v563 = vmul.f32 %v498, %v561
    %v564 = vmul.f32 %v499, %v561
    %v565 = vmul.f32 %v500, %v561
    %v566 = vmul.f32 %v501, %v561
    %v567 = vmul.f32 %v502, %v561
    %v568 = vmul.f32 %v503, %v561
    %v569 = vmul.f32 %v504, %v561
    %v570 = vmul.f32 %v505, %v561
    %v571 = vmul.f32 %v506, %v561
    %v572 = vmul.f32 %v507, %v561
    %v573 = vmul.f32 %v508, %v561
    %v574 = vmul.f32 %v509, %v561
    %v575 = vmul.f32 %v510, %v561
    %v576 = vmul.f32 %v511, %v561
    %v577 = vmul.f32 %v512, %v561
    %v578 = vmul.f32 %v513, %v561
    %v579 = vmul.f32 %v514, %v561
    %v580 = vmul.f32 %v515, %v561
    %v581 = vmul.f32 %v516, %v561
    %v582 = vmul.f32 %v517, %v561
    %v583 = vmul.f32 %v518, %v561
    %v584 = vmul.f32 %v519, %v561
    %v585 = vmul.f32 %v520, %v561
    %v586 = vmul.f32 %v521, %v561
    %v587 = vmul.f32 %v522, %v561
    %v588 = vmul.f32 %v523, %v561
    %v589 = vmul.f32 %v524, %v561
    %v590 = vmul.f32 %v525, %v561
    %v591 = vmul.f32 %v526, %v561
    %v592 = vmul.f32 %v527, %v561
    %v593 = vmul.f32 %v528, %v561
    %v594 = vmul.f32 %v529, %v561
    %v595 = vmul.f32 %v530, %v561
    %v596 = vmul.f32 %v531, %v561
    %v597 = vmul.f32 %v532, %v561
    %v598 = vmul.f32 %v533, %v561
    %v599 = vmul.f32 %v534, %v561
    %v600 = vmul.f32 %v535, %v561
    %v601 = vmul.f32 %v536, %v561
    %v602 = vmul.f32 %v537, %v561
    %v603 = vmul.f32 %v538, %v561
    %v604 = vmul.f32 %v539, %v561
    %v605 = vmul.f32 %v540, %v561
    %v606 = vmul.f32 %v541, %v561
    %v607 = vmul.f32 %v542, %v561
    %v608 = vmul.f32 %v543, %v561
    %v609 = vmul.f32 %v544, %v561
    %v610 = vmul.f32 %v545, %v561
    %v611 = vmul.f32 %v546, %v561
    %v612 = vmul.f32 %v547, %v561
    %v613 = vmul.f32 %v548, %v561
    %v614 = vmul.f32 %v549, %v561
    %v615 = vmul.f32 %v550, %v561
    %v616 = vmul.f32 %v551, %v561
    %v617 = vmul.f32 %v552, %v561
    %v618 = vmul.f32 %v553, %v561
    %v619 = vmul.f32 %v554, %v561
    %v620 = vmul.f32 %v555, %v561
    %v621 = vmul.f32 %v556, %v561
    %v622 = vmul.f32 %v557, %v561
    %v623 = vmul.f32 %v558, %v561
    %v624 = vmul.f32 %v559, %v561
    %v625 = vmul.f32 %v560, %v561
    %v626 = vadd.f32 %v433, %v562
    %v627 = vadd.f32 %v434, %v563
    %v628 = vadd.f32 %v435, %v564
    %v629 = vadd.f32 %v436, %v565
    %v630 = vadd.f32 %v437, %v566
    %v631 = vadd.f32 %v438, %v567
    %v632 = vadd.f32 %v439, %v568
    %v633 = vadd.f32 %v440, %v569
    %v634 = vadd.f32 %v441, %v570
    %v635 = vadd.f32 %v442, %v571
    %v636 = vadd.f32 %v443, %v572
    %v637 = vadd.f32 %v444, %v573
    %v638 = vadd.f32 %v445, %v574
    %v639 = vadd.f32 %v446, %v575
    %v640 = vadd.f32 %v447, %v576
    %v641 = vadd.f32 %v448, %v577
    %v642 = vadd.f32 %v449, %v578
    %v643 = vadd.f32 %v450, %v579
    %v644 = vadd.f32 %v451, %v580
    %v645 = vadd.f32 %v452, %v581
    %v646 = vadd.f32 %v453, %v582
    %v647 = vadd.f32 %v454, %v583
    %v648 = vadd.f32 %v455, %v584
    %v649 = vadd.f32 %v456, %v585
    %v650 = vadd.f32 %v457, %v586
    %v651 = vadd.f32 %v458, %v587
    %v652 = vadd.f32 %v459, %v588
    %v653 = vadd.f32 %v460, %v589
    %v654 = vadd.f32 %v461, %v590
    %v655 = vadd.f32 %v462, %v591
    %v656 = vadd.f32 %v463, %v592
    %v657 = vadd.f32 %v464, %v593
    %v658 = vadd.f32 %v465, %v594
    %v659 = vadd.f32 %v466, %v595
    %v660 = vadd.f32 %v467, %v596
    %v661 = vadd.f32 %v468, %v597
    %v662 = vadd.f32 %v469, %v598
    %v663 = vadd.f32 %v470, %v599
    %v664 = vadd.f32 %v471, %v600
    %v665 = vadd.f32 %v472, %v601
    %v666 = vadd.f32 %v473, %v602
    %v667 = vadd.f32 %v474, %v603
    %v668 = vadd.f32 %v475, %v604
    %v669 = vadd.f32 %v476, %v605
    %v670 = vadd.f32 %v477, %v606
    %v671 = vadd.f32 %v478, %v607
    %v672 = vadd.f32 %v479, %v608
    %v673 = vadd.f32 %v480, %v609
    %v674 = vadd.f32 %v481, %v610
    %v675 = vadd.f32 %v482, %v611
    %v676 = vadd.f32 %v483, %v612
    %v677 = vadd.f32 %v484, %v613
    %v678 = vadd.f32 %v485, %v614
    %v679 = vadd.f32 %v486, %v615
    %v680 = vadd.f32 %v487, %v616
    %v681 = vadd.f32 %v488, %v617
    %v682 = vadd.f32 %v489, %v618
    %v683 = vadd.f32 %v490, %v619
    %v684 = vadd.f32 %v491, %v620
    %v685 = vadd.f32 %v492, %v621
    %v686 = vadd.f32 %v493, %v622
    %v687 = vadd.f32 %v494, %v623
    %v688 = vadd.f32 %v495, %v624
    %v689 = vadd.f32 %v496, %v625
    %v690 = vld [vmem:[#allocation2 + $0x2] sm:$0xff]
    %v691 = vld [vmem:[#allocation2 + $0xa] sm:$0xff]
    %v692 = vld [vmem:[#allocation2 + $0x1a] sm:$0xff]
    %v693 = vld [vmem:[#allocation2 + $0x22] sm:$0xff]
    %v694 = vld [vmem:[#allocation2 + $0x32] sm:$0xff]
    %v695 = vld [vmem:[#allocation2 + $0x3a] sm:$0xff]
    %v696 = vld [vmem:[#allocation2 + $0x4a] sm:$0xff]
    %v697 = vld [vmem:[#allocation2 + $0x52] sm:$0xff]
    %v698 = vld [vmem:[#allocation2 + $0x62] sm:$0xff]
    %v699 = vld [vmem:[#allocation2 + $0x6a] sm:$0xff]
    %v700 = vld [vmem:[#allocation2 + $0x7a] sm:$0xff]
    %v701 = vld [vmem:[#allocation2 + $0x82] sm:$0xff]
    %v702 = vld [vmem:[#allocation2 + $0x92] sm:$0xff]
    %v703 = vld [vmem:[#allocation2 + $0x9a] sm:$0xff]
    %v704 = vld [vmem:[#allocation2 + $0xaa] sm:$0xff]
    %v705 = vld [vmem:[#allocation2 + $0xb2] sm:$0xff]
    %v706 = vld [vmem:[#allocation2 + $0xc2] sm:$0xff]
    %v707 = vld [vmem:[#allocation2 + $0xca] sm:$0xff]
    %v708 = vld [vmem:[#allocation2 + $0xda] sm:$0xff]
    %v709 = vld [vmem:[#allocation2 + $0xe2] sm:$0xff]
    %v710 = vld [vmem:[#allocation2 + $0xf2] sm:$0xff]
    %v711 = vld [vmem:[#allocation2 + $0xfa] sm:$0xff]
    %v712 = vld [vmem:[#allocation2 + $0x10a] sm:$0xff]
    %v713 = vld [vmem:[#allocation2 + $0x112] sm:$0xff]
    %v714 = vld [vmem:[#allocation2 + $0x122] sm:$0xff]
    %v715 = vld [vmem:[#allocation2 + $0x12a] sm:$0xff]
    %v716 = vld [vmem:[#allocation2 + $0x13a] sm:$0xff]
    %v717 = vld [vmem:[#allocation2 + $0x142] sm:$0xff]
    %v718 = vld [vmem:[#allocation2 + $0x152] sm:$0xff]
    %v719 = vld [vmem:[#allocation2 + $0x15a] sm:$0xff]
    %v720 = vld [vmem:[#allocation2 + $0x16a] sm:$0xff]
    %v721 = vld [vmem:[#allocation2 + $0x172] sm:$0xff]
    %v722 = vld [vmem:[#allocation2 + $0x1b2] sm:$0xff]
    %v723 = vld [vmem:[#allocation2 + $0x1ba] sm:$0xff]
    %v724 = vld [vmem:[#allocation2 + $0x1ca] sm:$0xff]
    %v725 = vld [vmem:[#allocation2 + $0x1d2] sm:$0xff]
    %v726 = vld [vmem:[#allocation2 + $0x1e2] sm:$0xff]
    %v727 = vld [vmem:[#allocation2 + $0x1ea] sm:$0xff]
    %v728 = vld [vmem:[#allocation2 + $0x1fa] sm:$0xff]
    %v729 = vld [vmem:[#allocation2 + $0x202] sm:$0xff]
    %v730 = vld [vmem:[#allocation2 + $0x212] sm:$0xff]
    %v731 = vld [vmem:[#allocation2 + $0x21a] sm:$0xff]
    %v732 = vld [vmem:[#allocation2 + $0x22a] sm:$0xff]
    %v733 = vld [vmem:[#allocation2 + $0x232] sm:$0xff]
    %v734 = vld [vmem:[#allocation2 + $0x242] sm:$0xff]
    %v735 = vld [vmem:[#allocation2 + $0x24a] sm:$0xff]
    %v736 = vld [vmem:[#allocation2 + $0x25a] sm:$0xff]
    %v737 = vld [vmem:[#allocation2 + $0x262] sm:$0xff]
    %v738 = vld [vmem:[#allocation2 + $0x272] sm:$0xff]
    %v739 = vld [vmem:[#allocation2 + $0x27a] sm:$0xff]
    %v740 = vld [vmem:[#allocation2 + $0x28a] sm:$0xff]
    %v741 = vld [vmem:[#allocation2 + $0x292] sm:$0xff]
    %v742 = vld [vmem:[#allocation2 + $0x2a2] sm:$0xff]
    %v743 = vld [vmem:[#allocation2 + $0x2aa] sm:$0xff]
    %v744 = vld [vmem:[#allocation2 + $0x2ba] sm:$0xff]
    %v745 = vld [vmem:[#allocation2 + $0x2c2] sm:$0xff]
    %v746 = vld [vmem:[#allocation2 + $0x2d2] sm:$0xff]
    %v747 = vld [vmem:[#allocation2 + $0x2da] sm:$0xff]
    %v748 = vld [vmem:[#allocation2 + $0x2ea] sm:$0xff]
    %v749 = vld [vmem:[#allocation2 + $0x2f2] sm:$0xff]
    %v750 = vld [vmem:[#allocation2 + $0x302] sm:$0xff]
    %v751 = vld [vmem:[#allocation2 + $0x30a] sm:$0xff]
    %v752 = vld [vmem:[#allocation2 + $0x31a] sm:$0xff]
    %v753 = vld [vmem:[#allocation2 + $0x322] sm:$0xff]
    %v754 = vperm.slane %v302, 2
    %v755 = vmul.f32 %v690, %v754
    %v756 = vmul.f32 %v691, %v754
    %v757 = vmul.f32 %v692, %v754
    %v758 = vmul.f32 %v693, %v754
    %v759 = vmul.f32 %v694, %v754
    %v760 = vmul.f32 %v695, %v754
    %v761 = vmul.f32 %v696, %v754
    %v762 = vmul.f32 %v697, %v754
    %v763 = vmul.f32 %v698, %v754
    %v764 = vmul.f32 %v699, %v754
    %v765 = vmul.f32 %v700, %v754
    %v766 = vmul.f32 %v701, %v754
    %v767 = vmul.f32 %v702, %v754
    %v768 = vmul.f32 %v703, %v754
    %v769 = vmul.f32 %v704, %v754
    %v770 = vmul.f32 %v705, %v754
    %v771 = vmul.f32 %v706, %v754
    %v772 = vmul.f32 %v707, %v754
    %v773 = vmul.f32 %v708, %v754
    %v774 = vmul.f32 %v709, %v754
    %v775 = vmul.f32 %v710, %v754
    %v776 = vmul.f32 %v711, %v754
    %v777 = vmul.f32 %v712, %v754
    %v778 = vmul.f32 %v713, %v754
    %v779 = vmul.f32 %v714, %v754
    %v780 = vmul.f32 %v715, %v754
    %v781 = vmul.f32 %v716, %v754
    %v782 = vmul.f32 %v717, %v754
    %v783 = vmul.f32 %v718, %v754
    %v784 = vmul.f32 %v719, %v754
    %v785 = vmul.f32 %v720, %v754
    %v786 = vmul.f32 %v721, %v754
    %v787 = vmul.f32 %v722, %v754
    %v788 = vmul.f32 %v723, %v754
    %v789 = vmul.f32 %v724, %v754
    %v790 = vmul.f32 %v725, %v754
    %v791 = vmul.f32 %v726, %v754
    %v792 = vmul.f32 %v727, %v754
    %v793 = vmul.f32 %v728, %v754
    %v794 = vmul.f32 %v729, %v754
    %v795 = vmul.f32 %v730, %v754
    %v796 = vmul.f32 %v731, %v754
    %v797 = vmul.f32 %v732, %v754
    %v798 = vmul.f32 %v733, %v754
    %v799 = vmul.f32 %v734, %v754
    %v800 = vmul.f32 %v735, %v754
    %v801 = vmul.f32 %v736, %v754
    %v802 = vmul.f32 %v737, %v754
    %v803 = vmul.f32 %v738, %v754
    %v804 = vmul.f32 %v739, %v754
    %v805 = vmul.f32 %v740, %v754
    %v806 = vmul.f32 %v741, %v754
    %v807 = vmul.f32 %v742, %v754
    %v808 = vmul.f32 %v743, %v754
    %v809 = vmul.f32 %v744, %v754
    %v810 = vmul.f32 %v745, %v754
    %v811 = vmul.f32 %v746, %v754
    %v812 = vmul.f32 %v747, %v754
    %v813 = vmul.f32 %v748, %v754
    %v814 = vmul.f32 %v749, %v754
    %v815 = vmul.f32 %v750, %v754
    %v816 = vmul.f32 %v751, %v754
    %v817 = vmul.f32 %v752, %v754
    %v818 = vmul.f32 %v753, %v754
    %v819 = vadd.f32 %v626, %v755
    %v820 = vadd.f32 %v627, %v756
    %v821 = vadd.f32 %v628, %v757
    %v822 = vadd.f32 %v629, %v758
    %v823 = vadd.f32 %v630, %v759
    %v824 = vadd.f32 %v631, %v760
    %v825 = vadd.f32 %v632, %v761
    %v826 = vadd.f32 %v633, %v762
    %v827 = vadd.f32 %v634, %v763
    %v828 = vadd.f32 %v635, %v764
    %v829 = vadd.f32 %v636, %v765
    %v830 = vadd.f32 %v637, %v766
    %v831 = vadd.f32 %v638, %v767
    %v832 = vadd.f32 %v639, %v768
    %v833 = vadd.f32 %v640, %v769
    %v834 = vadd.f32 %v641, %v770
    %v835 = vadd.f32 %v642, %v771
    %v836 = vadd.f32 %v643, %v772
    %v837 = vadd.f32 %v644, %v773
    %v838 = vadd.f32 %v645, %v774
    %v839 = vadd.f32 %v646, %v775
    %v840 = vadd.f32 %v647, %v776
    %v841 = vadd.f32 %v648, %v777
    %v842 = vadd.f32 %v649, %v778
    %v843 = vadd.f32 %v650, %v779
    %v844 = vadd.f32 %v651, %v780
    %v845 = vadd.f32 %v652, %v781
    %v846 = vadd.f32 %v653, %v782
    %v847 = vadd.f32 %v654, %v783
    %v848 = vadd.f32 %v655, %v784
    %v849 = vadd.f32 %v656, %v785
    %v850 = vadd.f32 %v657, %v786
    %v851 = vadd.f32 %v658, %v787
    %v852 = vadd.f32 %v659, %v788
    %v853 = vadd.f32 %v660, %v789
    %v854 = vadd.f32 %v661, %v790
    %v855 = vadd.f32 %v662, %v791
    %v856 = vadd.f32 %v663, %v792
    %v857 = vadd.f32 %v664, %v793
    %v858 = vadd.f32 %v665, %v794
    %v859 = vadd.f32 %v666, %v795
    %v860 = vadd.f32 %v667, %v796
    %v861 = vadd.f32 %v668, %v797
    %v862 = vadd.f32 %v669, %v798
    %v863 = vadd.f32 %v670, %v799
    %v864 = vadd.f32 %v671, %v800
    %v865 = vadd.f32 %v672, %v801
    %v866 = vadd.f32 %v673, %v802
    %v867 = vadd.f32 %v674, %v803
    %v868 = vadd.f32 %v675, %v804
    %v869 = vadd.f32 %v676, %v805
    %v870 = vadd.f32 %v677, %v806
    %v871 = vadd.f32 %v678, %v807
    %v872 = vadd.f32 %v679, %v808
    %v873 = vadd.f32 %v680, %v809
    %v874 = vadd.f32 %v681, %v810
    %v875 = vadd.f32 %v682, %v811
    %v876 = vadd.f32 %v683, %v812
    %v877 = vadd.f32 %v684, %v813
    %v878 = vadd.f32 %v685, %v814
    %v879 = vadd.f32 %v686, %v815
    %v880 = vadd.f32 %v687, %v816
    %v881 = vadd.f32 %v688, %v817
    %v882 = vadd.f32 %v689, %v818
    %v883 = vld [vmem:[%s237] sm:$0xff]
    %v884 = vld [vmem:[%s237 + $0x8] sm:$0xff]
    %v885 = vld [vmem:[%s237 + $0x18] sm:$0xff]
    %v886 = vld [vmem:[%s237 + $0x20] sm:$0xff]
    %v887 = vld [vmem:[%s237 + $0x30] sm:$0xff]
    %v888 = vld [vmem:[%s237 + $0x38] sm:$0xff]
    %v889 = vld [vmem:[%s237 + $0x48] sm:$0xff]
    %v890 = vld [vmem:[%s237 + $0x50] sm:$0xff]
    %v891 = vld [vmem:[%s237 + $0x60] sm:$0xff]
    %v892 = vld [vmem:[%s237 + $0x68] sm:$0xff]
    %v893 = vld [vmem:[%s237 + $0x78] sm:$0xff]
    %v894 = vld [vmem:[%s237 + $0x80] sm:$0xff]
    %v895 = vld [vmem:[%s237 + $0x90] sm:$0xff]
    %v896 = vld [vmem:[%s237 + $0x98] sm:$0xff]
    %v897 = vld [vmem:[%s237 + $0xa8] sm:$0xff]
    %v898 = vld [vmem:[%s237 + $0xb0] sm:$0xff]
    %v899 = vld [vmem:[%s237 + $0xc0] sm:$0xff]
    %v900 = vld [vmem:[%s237 + $0xc8] sm:$0xff]
    %v901 = vld [vmem:[%s237 + $0xd8] sm:$0xff]
    %v902 = vld [vmem:[%s237 + $0xe0] sm:$0xff]
    %v903 = vld [vmem:[%s237 + $0xf0] sm:$0xff]
    %v904 = vld [vmem:[%s237 + $0xf8] sm:$0xff]
    %v905 = vld [vmem:[%s237 + $0x108] sm:$0xff]
    %v906 = vld [vmem:[%s237 + $0x110] sm:$0xff]
    %v907 = vld [vmem:[%s237 + $0x120] sm:$0xff]
    %v908 = vld [vmem:[%s237 + $0x128] sm:$0xff]
    %v909 = vld [vmem:[%s237 + $0x138] sm:$0xff]
    %v910 = vld [vmem:[%s237 + $0x140] sm:$0xff]
    %v911 = vld [vmem:[%s237 + $0x150] sm:$0xff]
    %v912 = vld [vmem:[%s237 + $0x158] sm:$0xff]
    %v913 = vld [vmem:[%s237 + $0x168] sm:$0xff]
    %v914 = vld [vmem:[%s237 + $0x170] sm:$0xff]
    %v915 = vld [vmem:[%s237 + $0x1b0] sm:$0xff]
    %v916 = vld [vmem:[%s237 + $0x1b8] sm:$0xff]
    %v917 = vld [vmem:[%s237 + $0x1c8] sm:$0xff]
    %v918 = vld [vmem:[%s237 + $0x1d0] sm:$0xff]
    %v919 = vld [vmem:[%s237 + $0x1e0] sm:$0xff]
    %v920 = vld [vmem:[%s237 + $0x1e8] sm:$0xff]
    %v921 = vld [vmem:[%s237 + $0x1f8] sm:$0xff]
    %v922 = vld [vmem:[%s237 + $0x200] sm:$0xff]
    %v923 = vld [vmem:[%s237 + $0x210] sm:$0xff]
    %v924 = vld [vmem:[%s237 + $0x218] sm:$0xff]
    %v925 = vld [vmem:[%s237 + $0x228] sm:$0xff]
    %v926 = vld [vmem:[%s237 + $0x230] sm:$0xff]
    %v927 = vld [vmem:[%s237 + $0x240] sm:$0xff]
    %v928 = vld [vmem:[%s237 + $0x248] sm:$0xff]
    %v929 = vld [vmem:[%s237 + $0x258] sm:$0xff]
    %v930 = vld [vmem:[%s237 + $0x260] sm:$0xff]
    %v931 = vld [vmem:[%s237 + $0x270] sm:$0xff]
    %v932 = vld [vmem:[%s237 + $0x278] sm:$0xff]
    %v933 = vld [vmem:[%s237 + $0x288] sm:$0xff]
    %v934 = vld [vmem:[%s237 + $0x290] sm:$0xff]
    %v935 = vld [vmem:[%s237 + $0x2a0] sm:$0xff]
    %v936 = vld [vmem:[%s237 + $0x2a8] sm:$0xff]
    %v937 = vld [vmem:[%s237 + $0x2b8] sm:$0xff]
    %v938 = vld [vmem:[%s237 + $0x2c0] sm:$0xff]
    %v939 = vld [vmem:[%s237 + $0x2d0] sm:$0xff]
    %v940 = vld [vmem:[%s237 + $0x2d8] sm:$0xff]
    %v941 = vld [vmem:[%s237 + $0x2e8] sm:$0xff]
    %v942 = vld [vmem:[%s237 + $0x2f0] sm:$0xff]
    %v943 = vld [vmem:[%s237 + $0x300] sm:$0xff]
    %v944 = vld [vmem:[%s237 + $0x308] sm:$0xff]
    %v945 = vld [vmem:[%s237 + $0x318] sm:$0xff]
    %v946 = vld [vmem:[%s237 + $0x320] sm:$0xff]
    %v947 = vperm.slane %v302, 3
    %v948 = vmul.f32 %v883, %v947
    %v949 = vmul.f32 %v884, %v947
    %v950 = vmul.f32 %v885, %v947
    %v951 = vmul.f32 %v886, %v947
    %v952 = vmul.f32 %v887, %v947
    %v953 = vmul.f32 %v888, %v947
    %v954 = vmul.f32 %v889, %v947
    %v955 = vmul.f32 %v890, %v947
    %v956 = vmul.f32 %v891, %v947
    %v957 = vmul.f32 %v892, %v947
    %v958 = vmul.f32 %v893, %v947
    %v959 = vmul.f32 %v894, %v947
    %v960 = vmul.f32 %v895, %v947
    %v961 = vmul.f32 %v896, %v947
    %v962 = vmul.f32 %v897, %v947
    %v963 = vmul.f32 %v898, %v947
    %v964 = vmul.f32 %v899, %v947
    %v965 = vmul.f32 %v900, %v947
    %v966 = vmul.f32 %v901, %v947
    %v967 = vmul.f32 %v902, %v947
    %v968 = vmul.f32 %v903, %v947
    %v969 = vmul.f32 %v904, %v947
    %v970 = vmul.f32 %v905, %v947
    %v971 = vmul.f32 %v906, %v947
    %v972 = vmul.f32 %v907, %v947
    %v973 = vmul.f32 %v908, %v947
    %v974 = vmul.f32 %v909, %v947
    %v975 = vmul.f32 %v910, %v947
    %v976 = vmul.f32 %v911, %v947
    %v977 = vmul.f32 %v912, %v947
    %v978 = vmul.f32 %v913, %v947
    %v979 = vmul.f32 %v914, %v947
    %v980 = vmul.f32 %v915, %v947
    %v981 = vmul.f32 %v916, %v947
    %v982 = vmul.f32 %v917, %v947
    %v983 = vmul.f32 %v918, %v947
    %v984 = vmul.f32 %v919, %v947
    %v985 = vmul.f32 %v920, %v947
    %v986 = vmul.f32 %v921, %v947
    %v987 = vmul.f32 %v922, %v947
    %v988 = vmul.f32 %v923, %v947
    %v989 = vmul.f32 %v924, %v947
    %v990 = vmul.f32 %v925, %v947
    %v991 = vmul.f32 %v926, %v947
    %v992 = vmul.f32 %v927, %v947
    %v993 = vmul.f32 %v928, %v947
    %v994 = vmul.f32 %v929, %v947
    %v995 = vmul.f32 %v930, %v947
    %v996 = vmul.f32 %v931, %v947
    %v997 = vmul.f32 %v932, %v947
    %v998 = vmul.f32 %v933, %v947
    %v999 = vmul.f32 %v934, %v947
    %v1000 = vmul.f32 %v935, %v947
    %v1001 = vmul.f32 %v936, %v947
    %v1002 = vmul.f32 %v937, %v947
    %v1003 = vmul.f32 %v938, %v947
    %v1004 = vmul.f32 %v939, %v947
    %v1005 = vmul.f32 %v940, %v947
    %v1006 = vmul.f32 %v941, %v947
    %v1007 = vmul.f32 %v942, %v947
    %v1008 = vmul.f32 %v943, %v947
    %v1009 = vmul.f32 %v944, %v947
    %v1010 = vmul.f32 %v945, %v947
    %v1011 = vmul.f32 %v946, %v947
    %v1012 = vadd.f32 %v819, %v948
    %v1013 = vadd.f32 %v820, %v949
    %v1014 = vadd.f32 %v821, %v950
    %v1015 = vadd.f32 %v822, %v951
    %v1016 = vadd.f32 %v823, %v952
    %v1017 = vadd.f32 %v824, %v953
    %v1018 = vadd.f32 %v825, %v954
    %v1019 = vadd.f32 %v826, %v955
    %v1020 = vadd.f32 %v827, %v956
    %v1021 = vadd.f32 %v828, %v957
    %v1022 = vadd.f32 %v829, %v958
    %v1023 = vadd.f32 %v830, %v959
    %v1024 = vadd.f32 %v831, %v960
    %v1025 = vadd.f32 %v832, %v961
    %v1026 = vadd.f32 %v833, %v962
    %v1027 = vadd.f32 %v834, %v963
    %v1028 = vadd.f32 %v835, %v964
    %v1029 = vadd.f32 %v836, %v965
    %v1030 = vadd.f32 %v837, %v966
    %v1031 = vadd.f32 %v838, %v967
    %v1032 = vadd.f32 %v839, %v968
    %v1033 = vadd.f32 %v840, %v969
    %v1034 = vadd.f32 %v841, %v970
    %v1035 = vadd.f32 %v842, %v971
    %v1036 = vadd.f32 %v843, %v972
    %v1037 = vadd.f32 %v844, %v973
    %v1038 = vadd.f32 %v845, %v974
    %v1039 = vadd.f32 %v846, %v975
    %v1040 = vadd.f32 %v847, %v976
    %v1041 = vadd.f32 %v848, %v977
    %v1042 = vadd.f32 %v849, %v978
    %v1043 = vadd.f32 %v850, %v979
    %v1044 = vadd.f32 %v851, %v980
    %v1045 = vadd.f32 %v852, %v981
    %v1046 = vadd.f32 %v853, %v982
    %v1047 = vadd.f32 %v854, %v983
    %v1048 = vadd.f32 %v855, %v984
    %v1049 = vadd.f32 %v856, %v985
    %v1050 = vadd.f32 %v857, %v986
    %v1051 = vadd.f32 %v858, %v987
    %v1052 = vadd.f32 %v859, %v988
    %v1053 = vadd.f32 %v860, %v989
    %v1054 = vadd.f32 %v861, %v990
    %v1055 = vadd.f32 %v862, %v991
    %v1056 = vadd.f32 %v863, %v992
    %v1057 = vadd.f32 %v864, %v993
    %v1058 = vadd.f32 %v865, %v994
    %v1059 = vadd.f32 %v866, %v995
    %v1060 = vadd.f32 %v867, %v996
    %v1061 = vadd.f32 %v868, %v997
    %v1062 = vadd.f32 %v869, %v998
    %v1063 = vadd.f32 %v870, %v999
    %v1064 = vadd.f32 %v871, %v1000
    %v1065 = vadd.f32 %v872, %v1001
    %v1066 = vadd.f32 %v873, %v1002
    %v1067 = vadd.f32 %v874, %v1003
    %v1068 = vadd.f32 %v875, %v1004
    %v1069 = vadd.f32 %v876, %v1005
    %v1070 = vadd.f32 %v877, %v1006
    %v1071 = vadd.f32 %v878, %v1007
    %v1072 = vadd.f32 %v879, %v1008
    %v1073 = vadd.f32 %v880, %v1009
    %v1074 = vadd.f32 %v881, %v1010
    %v1075 = vadd.f32 %v882, %v1011
    %v1076 = vld [vmem:[%s237 + $0x1] sm:$0xff]
    %v1077 = vld [vmem:[%s237 + $0x9] sm:$0xff]
    %v1078 = vld [vmem:[%s237 + $0x19] sm:$0xff]
    %v1079 = vld [vmem:[%s237 + $0x21] sm:$0xff]
    %v1080 = vld [vmem:[%s237 + $0x31] sm:$0xff]
    %v1081 = vld [vmem:[%s237 + $0x39] sm:$0xff]
    %v1082 = vld [vmem:[%s237 + $0x49] sm:$0xff]
    %v1083 = vld [vmem:[%s237 + $0x51] sm:$0xff]
    %v1084 = vld [vmem:[%s237 + $0x61] sm:$0xff]
    %v1085 = vld [vmem:[%s237 + $0x69] sm:$0xff]
    %v1086 = vld [vmem:[%s237 + $0x79] sm:$0xff]
    %v1087 = vld [vmem:[%s237 + $0x81] sm:$0xff]
    %v1088 = vld [vmem:[%s237 + $0x91] sm:$0xff]
    %v1089 = vld [vmem:[%s237 + $0x99] sm:$0xff]
    %v1090 = vld [vmem:[%s237 + $0xa9] sm:$0xff]
    %v1091 = vld [vmem:[%s237 + $0xb1] sm:$0xff]
    %v1092 = vld [vmem:[%s237 + $0xc1] sm:$0xff]
    %v1093 = vld [vmem:[%s237 + $0xc9] sm:$0xff]
    %v1094 = vld [vmem:[%s237 + $0xd9] sm:$0xff]
    %v1095 = vld [vmem:[%s237 + $0xe1] sm:$0xff]
    %v1096 = vld [vmem:[%s237 + $0xf1] sm:$0xff]
    %v1097 = vld [vmem:[%s237 + $0xf9] sm:$0xff]
    %v1098 = vld [vmem:[%s237 + $0x109] sm:$0xff]
    %v1099 = vld [vmem:[%s237 + $0x111] sm:$0xff]
    %v1100 = vld [vmem:[%s237 + $0x121] sm:$0xff]
    %v1101 = vld [vmem:[%s237 + $0x129] sm:$0xff]
    %v1102 = vld [vmem:[%s237 + $0x139] sm:$0xff]
    %v1103 = vld [vmem:[%s237 + $0x141] sm:$0xff]
    %v1104 = vld [vmem:[%s237 + $0x151] sm:$0xff]
    %v1105 = vld [vmem:[%s237 + $0x159] sm:$0xff]
    %v1106 = vld [vmem:[%s237 + $0x169] sm:$0xff]
    %v1107 = vld [vmem:[%s237 + $0x171] sm:$0xff]
    %v1108 = vld [vmem:[%s237 + $0x1b1] sm:$0xff]
    %v1109 = vld [vmem:[%s237 + $0x1b9] sm:$0xff]
    %v1110 = vld [vmem:[%s237 + $0x1c9] sm:$0xff]
    %v1111 = vld [vmem:[%s237 + $0x1d1] sm:$0xff]
    %v1112 = vld [vmem:[%s237 + $0x1e1] sm:$0xff]
    %v1113 = vld [vmem:[%s237 + $0x1e9] sm:$0xff]
    %v1114 = vld [vmem:[%s237 + $0x1f9] sm:$0xff]
    %v1115 = vld [vmem:[%s237 + $0x201] sm:$0xff]
    %v1116 = vld [vmem:[%s237 + $0x211] sm:$0xff]
    %v1117 = vld [vmem:[%s237 + $0x219] sm:$0xff]
    %v1118 = vld [vmem:[%s237 + $0x229] sm:$0xff]
    %v1119 = vld [vmem:[%s237 + $0x231] sm:$0xff]
    %v1120 = vld [vmem:[%s237 + $0x241] sm:$0xff]
    %v1121 = vld [vmem:[%s237 + $0x249] sm:$0xff]
    %v1122 = vld [vmem:[%s237 + $0x259] sm:$0xff]
    %v1123 = vld [vmem:[%s237 + $0x261] sm:$0xff]
    %v1124 = vld [vmem:[%s237 + $0x271] sm:$0xff]
    %v1125 = vld [vmem:[%s237 + $0x279] sm:$0xff]
    %v1126 = vld [vmem:[%s237 + $0x289] sm:$0xff]
    %v1127 = vld [vmem:[%s237 + $0x291] sm:$0xff]
    %v1128 = vld [vmem:[%s237 + $0x2a1] sm:$0xff]
    %v1129 = vld [vmem:[%s237 + $0x2a9] sm:$0xff]
    %v1130 = vld [vmem:[%s237 + $0x2b9] sm:$0xff]
    %v1131 = vld [vmem:[%s237 + $0x2c1] sm:$0xff]
    %v1132 = vld [vmem:[%s237 + $0x2d1] sm:$0xff]
    %v1133 = vld [vmem:[%s237 + $0x2d9] sm:$0xff]
    %v1134 = vld [vmem:[%s237 + $0x2e9] sm:$0xff]
    %v1135 = vld [vmem:[%s237 + $0x2f1] sm:$0xff]
    %v1136 = vld [vmem:[%s237 + $0x301] sm:$0xff]
    %v1137 = vld [vmem:[%s237 + $0x309] sm:$0xff]
    %v1138 = vld [vmem:[%s237 + $0x319] sm:$0xff]
    %v1139 = vld [vmem:[%s237 + $0x321] sm:$0xff]
    %v1140 = vperm.slane %v302, 4
    %v1141 = vmul.f32 %v1076, %v1140
    %v1142 = vmul.f32 %v1077, %v1140
    %v1143 = vmul.f32 %v1078, %v1140
    %v1144 = vmul.f32 %v1079, %v1140
    %v1145 = vmul.f32 %v1080, %v1140
    %v1146 = vmul.f32 %v1081, %v1140
    %v1147 = vmul.f32 %v1082, %v1140
    %v1148 = vmul.f32 %v1083, %v1140
    %v1149 = vmul.f32 %v1084, %v1140
    %v1150 = vmul.f32 %v1085, %v1140
    %v1151 = vmul.f32 %v1086, %v1140
    %v1152 = vmul.f32 %v1087, %v1140
    %v1153 = vmul.f32 %v1088, %v1140
    %v1154 = vmul.f32 %v1089, %v1140
    %v1155 = vmul.f32 %v1090, %v1140
    %v1156 = vmul.f32 %v1091, %v1140
    %v1157 = vmul.f32 %v1092, %v1140
    %v1158 = vmul.f32 %v1093, %v1140
    %v1159 = vmul.f32 %v1094, %v1140
    %v1160 = vmul.f32 %v1095, %v1140
    %v1161 = vmul.f32 %v1096, %v1140
    %v1162 = vmul.f32 %v1097, %v1140
    %v1163 = vmul.f32 %v1098, %v1140
    %v1164 = vmul.f32 %v1099, %v1140
    %v1165 = vmul.f32 %v1100, %v1140
    %v1166 = vmul.f32 %v1101, %v1140
    %v1167 = vmul.f32 %v1102, %v1140
    %v1168 = vmul.f32 %v1103, %v1140
    %v1169 = vmul.f32 %v1104, %v1140
    %v1170 = vmul.f32 %v1105, %v1140
    %v1171 = vmul.f32 %v1106, %v1140
    %v1172 = vmul.f32 %v1107, %v1140
    %v1173 = vmul.f32 %v1108, %v1140
    %v1174 = vmul.f32 %v1109, %v1140
    %v1175 = vmul.f32 %v1110, %v1140
    %v1176 = vmul.f32 %v1111, %v1140
    %v1177 = vmul.f32 %v1112, %v1140
    %v1178 = vmul.f32 %v1113, %v1140
    %v1179 = vmul.f32 %v1114, %v1140
    %v1180 = vmul.f32 %v1115, %v1140
    %v1181 = vmul.f32 %v1116, %v1140
    %v1182 = vmul.f32 %v1117, %v1140
    %v1183 = vmul.f32 %v1118, %v1140
    %v1184 = vmul.f32 %v1119, %v1140
    %v1185 = vmul.f32 %v1120, %v1140
    %v1186 = vmul.f32 %v1121, %v1140
    %v1187 = vmul.f32 %v1122, %v1140
    %v1188 = vmul.f32 %v1123, %v1140
    %v1189 = vmul.f32 %v1124, %v1140
    %v1190 = vmul.f32 %v1125, %v1140
    %v1191 = vmul.f32 %v1126, %v1140
    %v1192 = vmul.f32 %v1127, %v1140
    %v1193 = vmul.f32 %v1128, %v1140
    %v1194 = vmul.f32 %v1129, %v1140
    %v1195 = vmul.f32 %v1130, %v1140
    %v1196 = vmul.f32 %v1131, %v1140
    %v1197 = vmul.f32 %v1132, %v1140
    %v1198 = vmul.f32 %v1133, %v1140
    %v1199 = vmul.f32 %v1134, %v1140
    %v1200 = vmul.f32 %v1135, %v1140
    %v1201 = vmul.f32 %v1136, %v1140
    %v1202 = vmul.f32 %v1137, %v1140
    %v1203 = vmul.f32 %v1138, %v1140
    %v1204 = vmul.f32 %v1139, %v1140
    %v1205 = vadd.f32 %v1012, %v1141
    %v1206 = vadd.f32 %v1013, %v1142
    %v1207 = vadd.f32 %v1014, %v1143
    %v1208 = vadd.f32 %v1015, %v1144
    %v1209 = vadd.f32 %v1016, %v1145
    %v1210 = vadd.f32 %v1017, %v1146
    %v1211 = vadd.f32 %v1018, %v1147
    %v1212 = vadd.f32 %v1019, %v1148
    %v1213 = vadd.f32 %v1020, %v1149
    %v1214 = vadd.f32 %v1021, %v1150
    %v1215 = vadd.f32 %v1022, %v1151
    %v1216 = vadd.f32 %v1023, %v1152
    %v1217 = vadd.f32 %v1024, %v1153
    %v1218 = vadd.f32 %v1025, %v1154
    %v1219 = vadd.f32 %v1026, %v1155
    %v1220 = vadd.f32 %v1027, %v1156
    %v1221 = vadd.f32 %v1028, %v1157
    %v1222 = vadd.f32 %v1029, %v1158
    %v1223 = vadd.f32 %v1030, %v1159
    %v1224 = vadd.f32 %v1031, %v1160
    %v1225 = vadd.f32 %v1032, %v1161
    %v1226 = vadd.f32 %v1033, %v1162
    %v1227 = vadd.f32 %v1034, %v1163
    %v1228 = vadd.f32 %v1035, %v1164
    %v1229 = vadd.f32 %v1036, %v1165
    %v1230 = vadd.f32 %v1037, %v1166
    %v1231 = vadd.f32 %v1038, %v1167
    %v1232 = vadd.f32 %v1039, %v1168
    %v1233 = vadd.f32 %v1040, %v1169
    %v1234 = vadd.f32 %v1041, %v1170
    %v1235 = vadd.f32 %v1042, %v1171
    %v1236 = vadd.f32 %v1043, %v1172
    %v1237 = vadd.f32 %v1044, %v1173
    %v1238 = vadd.f32 %v1045, %v1174
    %v1239 = vadd.f32 %v1046, %v1175
    %v1240 = vadd.f32 %v1047, %v1176
    %v1241 = vadd.f32 %v1048, %v1177
    %v1242 = vadd.f32 %v1049, %v1178
    %v1243 = vadd.f32 %v1050, %v1179
    %v1244 = vadd.f32 %v1051, %v1180
    %v1245 = vadd.f32 %v1052, %v1181
    %v1246 = vadd.f32 %v1053, %v1182
    %v1247 = vadd.f32 %v1054, %v1183
    %v1248 = vadd.f32 %v1055, %v1184
    %v1249 = vadd.f32 %v1056, %v1185
    %v1250 = vadd.f32 %v1057, %v1186
    %v1251 = vadd.f32 %v1058, %v1187
    %v1252 = vadd.f32 %v1059, %v1188
    %v1253 = vadd.f32 %v1060, %v1189
    %v1254 = vadd.f32 %v1061, %v1190
    %v1255 = vadd.f32 %v1062, %v1191
    %v1256 = vadd.f32 %v1063, %v1192
    %v1257 = vadd.f32 %v1064, %v1193
    %v1258 = vadd.f32 %v1065, %v1194
    %v1259 = vadd.f32 %v1066, %v1195
    %v1260 = vadd.f32 %v1067, %v1196
    %v1261 = vadd.f32 %v1068, %v1197
    %v1262 = vadd.f32 %v1069, %v1198
    %v1263 = vadd.f32 %v1070, %v1199
    %v1264 = vadd.f32 %v1071, %v1200
    %v1265 = vadd.f32 %v1072, %v1201
    %v1266 = vadd.f32 %v1073, %v1202
    %v1267 = vadd.f32 %v1074, %v1203
    %v1268 = vadd.f32 %v1075, %v1204
    %v1269 = vld [vmem:[%s237 + $0x2] sm:$0xff]
    %v1270 = vld [vmem:[%s237 + $0xa] sm:$0xff]
    %v1271 = vld [vmem:[%s237 + $0x1a] sm:$0xff]
    %v1272 = vld [vmem:[%s237 + $0x22] sm:$0xff]
    %v1273 = vld [vmem:[%s237 + $0x32] sm:$0xff]
    %v1274 = vld [vmem:[%s237 + $0x3a] sm:$0xff]
    %v1275 = vld [vmem:[%s237 + $0x4a] sm:$0xff]
    %v1276 = vld [vmem:[%s237 + $0x52] sm:$0xff]
    %v1277 = vld [vmem:[%s237 + $0x62] sm:$0xff]
    %v1278 = vld [vmem:[%s237 + $0x6a] sm:$0xff]
    %v1279 = vld [vmem:[%s237 + $0x7a] sm:$0xff]
    %v1280 = vld [vmem:[%s237 + $0x82] sm:$0xff]
    %v1281 = vld [vmem:[%s237 + $0x92] sm:$0xff]
    %v1282 = vld [vmem:[%s237 + $0x9a] sm:$0xff]
    %v1283 = vld [vmem:[%s237 + $0xaa] sm:$0xff]
    %v1284 = vld [vmem:[%s237 + $0xb2] sm:$0xff]
    %v1285 = vld [vmem:[%s237 + $0xc2] sm:$0xff]
    %v1286 = vld [vmem:[%s237 + $0xca] sm:$0xff]
    %v1287 = vld [vmem:[%s237 + $0xda] sm:$0xff]
    %v1288 = vld [vmem:[%s237 + $0xe2] sm:$0xff]
    %v1289 = vld [vmem:[%s237 + $0xf2] sm:$0xff]
    %v1290 = vld [vmem:[%s237 + $0xfa] sm:$0xff]
    %v1291 = vld [vmem:[%s237 + $0x10a] sm:$0xff]
    %v1292 = vld [vmem:[%s237 + $0x112] sm:$0xff]
    %v1293 = vld [vmem:[%s237 + $0x122] sm:$0xff]
    %v1294 = vld [vmem:[%s237 + $0x12a] sm:$0xff]
    %v1295 = vld [vmem:[%s237 + $0x13a] sm:$0xff]
    %v1296 = vld [vmem:[%s237 + $0x142] sm:$0xff]
    %v1297 = vld [vmem:[%s237 + $0x152] sm:$0xff]
    %v1298 = vld [vmem:[%s237 + $0x15a] sm:$0xff]
    %v1299 = vld [vmem:[%s237 + $0x16a] sm:$0xff]
    %v1300 = vld [vmem:[%s237 + $0x172] sm:$0xff]
    %v1301 = vld [vmem:[%s237 + $0x1b2] sm:$0xff]
    %v1302 = vld [vmem:[%s237 + $0x1ba] sm:$0xff]
    %v1303 = vld [vmem:[%s237 + $0x1ca] sm:$0xff]
    %v1304 = vld [vmem:[%s237 + $0x1d2] sm:$0xff]
    %v1305 = vld [vmem:[%s237 + $0x1e2] sm:$0xff]
    %v1306 = vld [vmem:[%s237 + $0x1ea] sm:$0xff]
    %v1307 = vld [vmem:[%s237 + $0x1fa] sm:$0xff]
    %v1308 = vld [vmem:[%s237 + $0x202] sm:$0xff]
    %v1309 = vld [vmem:[%s237 + $0x212] sm:$0xff]
    %v1310 = vld [vmem:[%s237 + $0x21a] sm:$0xff]
    %v1311 = vld [vmem:[%s237 + $0x22a] sm:$0xff]
    %v1312 = vld [vmem:[%s237 + $0x232] sm:$0xff]
    %v1313 = vld [vmem:[%s237 + $0x242] sm:$0xff]
    %v1314 = vld [vmem:[%s237 + $0x24a] sm:$0xff]
    %v1315 = vld [vmem:[%s237 + $0x25a] sm:$0xff]
    %v1316 = vld [vmem:[%s237 + $0x262] sm:$0xff]
    %v1317 = vld [vmem:[%s237 + $0x272] sm:$0xff]
    %v1318 = vld [vmem:[%s237 + $0x27a] sm:$0xff]
    %v1319 = vld [vmem:[%s237 + $0x28a] sm:$0xff]
    %v1320 = vld [vmem:[%s237 + $0x292] sm:$0xff]
    %v1321 = vld [vmem:[%s237 + $0x2a2] sm:$0xff]
    %v1322 = vld [vmem:[%s237 + $0x2aa] sm:$0xff]
    %v1323 = vld [vmem:[%s237 + $0x2ba] sm:$0xff]
    %v1324 = vld [vmem:[%s237 + $0x2c2] sm:$0xff]
    %v1325 = vld [vmem:[%s237 + $0x2d2] sm:$0xff]
    %v1326 = vld [vmem:[%s237 + $0x2da] sm:$0xff]
    %v1327 = vld [vmem:[%s237 + $0x2ea] sm:$0xff]
    %v1328 = vld [vmem:[%s237 + $0x2f2] sm:$0xff]
    %v1329 = vld [vmem:[%s237 + $0x302] sm:$0xff]
    %v1330 = vld [vmem:[%s237 + $0x30a] sm:$0xff]
    %v1331 = vld [vmem:[%s237 + $0x31a] sm:$0xff]
    %v1332 = vld [vmem:[%s237 + $0x322] sm:$0xff]
    %v1333 = vperm.slane %v302, 5
    %v1334 = vmul.f32 %v1269, %v1333
    %v1335 = vmul.f32 %v1270, %v1333
    %v1336 = vmul.f32 %v1271, %v1333
    %v1337 = vmul.f32 %v1272, %v1333
    %v1338 = vmul.f32 %v1273, %v1333
    %v1339 = vmul.f32 %v1274, %v1333
    %v1340 = vmul.f32 %v1275, %v1333
    %v1341 = vmul.f32 %v1276, %v1333
    %v1342 = vmul.f32 %v1277, %v1333
    %v1343 = vmul.f32 %v1278, %v1333
    %v1344 = vmul.f32 %v1279, %v1333
    %v1345 = vmul.f32 %v1280, %v1333
    %v1346 = vmul.f32 %v1281, %v1333
    %v1347 = vmul.f32 %v1282, %v1333
    %v1348 = vmul.f32 %v1283, %v1333
    %v1349 = vmul.f32 %v1284, %v1333
    %v1350 = vmul.f32 %v1285, %v1333
    %v1351 = vmul.f32 %v1286, %v1333
    %v1352 = vmul.f32 %v1287, %v1333
    %v1353 = vmul.f32 %v1288, %v1333
    %v1354 = vmul.f32 %v1289, %v1333
    %v1355 = vmul.f32 %v1290, %v1333
    %v1356 = vmul.f32 %v1291, %v1333
    %v1357 = vmul.f32 %v1292, %v1333
    %v1358 = vmul.f32 %v1293, %v1333
    %v1359 = vmul.f32 %v1294, %v1333
    %v1360 = vmul.f32 %v1295, %v1333
    %v1361 = vmul.f32 %v1296, %v1333
    %v1362 = vmul.f32 %v1297, %v1333
    %v1363 = vmul.f32 %v1298, %v1333
    %v1364 = vmul.f32 %v1299, %v1333
    %v1365 = vmul.f32 %v1300, %v1333
    %v1366 = vmul.f32 %v1301, %v1333
    %v1367 = vmul.f32 %v1302, %v1333
    %v1368 = vmul.f32 %v1303, %v1333
    %v1369 = vmul.f32 %v1304, %v1333
    %v1370 = vmul.f32 %v1305, %v1333
    %v1371 = vmul.f32 %v1306, %v1333
    %v1372 = vmul.f32 %v1307, %v1333
    %v1373 = vmul.f32 %v1308, %v1333
    %v1374 = vmul.f32 %v1309, %v1333
    %v1375 = vmul.f32 %v1310, %v1333
    %v1376 = vmul.f32 %v1311, %v1333
    %v1377 = vmul.f32 %v1312, %v1333
    %v1378 = vmul.f32 %v1313, %v1333
    %v1379 = vmul.f32 %v1314, %v1333
    %v1380 = vmul.f32 %v1315, %v1333
    %v1381 = vmul.f32 %v1316, %v1333
    %v1382 = vmul.f32 %v1317, %v1333
    %v1383 = vmul.f32 %v1318, %v1333
    %v1384 = vmul.f32 %v1319, %v1333
    %v1385 = vmul.f32 %v1320, %v1333
    %v1386 = vmul.f32 %v1321, %v1333
    %v1387 = vmul.f32 %v1322, %v1333
    %v1388 = vmul.f32 %v1323, %v1333
    %v1389 = vmul.f32 %v1324, %v1333
    %v1390 = vmul.f32 %v1325, %v1333
    %v1391 = vmul.f32 %v1326, %v1333
    %v1392 = vmul.f32 %v1327, %v1333
    %v1393 = vmul.f32 %v1328, %v1333
    %v1394 = vmul.f32 %v1329, %v1333
    %v1395 = vmul.f32 %v1330, %v1333
    %v1396 = vmul.f32 %v1331, %v1333
    %v1397 = vmul.f32 %v1332, %v1333
    %v1398 = vadd.f32 %v1205, %v1334
    %v1399 = vadd.f32 %v1206, %v1335
    %v1400 = vadd.f32 %v1207, %v1336
    %v1401 = vadd.f32 %v1208, %v1337
    %v1402 = vadd.f32 %v1209, %v1338
    %v1403 = vadd.f32 %v1210, %v1339
    %v1404 = vadd.f32 %v1211, %v1340
    %v1405 = vadd.f32 %v1212, %v1341
    %v1406 = vadd.f32 %v1213, %v1342
    %v1407 = vadd.f32 %v1214, %v1343
    %v1408 = vadd.f32 %v1215, %v1344
    %v1409 = vadd.f32 %v1216, %v1345
    %v1410 = vadd.f32 %v1217, %v1346
    %v1411 = vadd.f32 %v1218, %v1347
    %v1412 = vadd.f32 %v1219, %v1348
    %v1413 = vadd.f32 %v1220, %v1349
    %v1414 = vadd.f32 %v1221, %v1350
    %v1415 = vadd.f32 %v1222, %v1351
    %v1416 = vadd.f32 %v1223, %v1352
    %v1417 = vadd.f32 %v1224, %v1353
    %v1418 = vadd.f32 %v1225, %v1354
    %v1419 = vadd.f32 %v1226, %v1355
    %v1420 = vadd.f32 %v1227, %v1356
    %v1421 = vadd.f32 %v1228, %v1357
    %v1422 = vadd.f32 %v1229, %v1358
    %v1423 = vadd.f32 %v1230, %v1359
    %v1424 = vadd.f32 %v1231, %v1360
    %v1425 = vadd.f32 %v1232, %v1361
    %v1426 = vadd.f32 %v1233, %v1362
    %v1427 = vadd.f32 %v1234, %v1363
    %v1428 = vadd.f32 %v1235, %v1364
    %v1429 = vadd.f32 %v1236, %v1365
    %v1430 = vadd.f32 %v1237, %v1366
    %v1431 = vadd.f32 %v1238, %v1367
    %v1432 = vadd.f32 %v1239, %v1368
    %v1433 = vadd.f32 %v1240, %v1369
    %v1434 = vadd.f32 %v1241, %v1370
    %v1435 = vadd.f32 %v1242, %v1371
    %v1436 = vadd.f32 %v1243, %v1372
    %v1437 = vadd.f32 %v1244, %v1373
    %v1438 = vadd.f32 %v1245, %v1374
    %v1439 = vadd.f32 %v1246, %v1375
    %v1440 = vadd.f32 %v1247, %v1376
    %v1441 = vadd.f32 %v1248, %v1377
    %v1442 = vadd.f32 %v1249, %v1378
    %v1443 = vadd.f32 %v1250, %v1379
    %v1444 = vadd.f32 %v1251, %v1380
    %v1445 = vadd.f32 %v1252, %v1381
    %v1446 = vadd.f32 %v1253, %v1382
    %v1447 = vadd.f32 %v1254, %v1383
    %v1448 = vadd.f32 %v1255, %v1384
    %v1449 = vadd.f32 %v1256, %v1385
    %v1450 = vadd.f32 %v1257, %v1386
    %v1451 = vadd.f32 %v1258, %v1387
    %v1452 = vadd.f32 %v1259, %v1388
    %v1453 = vadd.f32 %v1260, %v1389
    %v1454 = vadd.f32 %v1261, %v1390
    %v1455 = vadd.f32 %v1262, %v1391
    %v1456 = vadd.f32 %v1263, %v1392
    %v1457 = vadd.f32 %v1264, %v1393
    %v1458 = vadd.f32 %v1265, %v1394
    %v1459 = vadd.f32 %v1266, %v1395
    %v1460 = vadd.f32 %v1267, %v1396
    %v1461 = vadd.f32 %v1268, %v1397
    %s1462 = scalar_lea.vmem [#allocation2], 48
    %v1463 = vld [vmem:[%s1462] sm:$0xff]
    %v1464 = vld [vmem:[%s1462 + $0x8] sm:$0xff]
    %v1465 = vld [vmem:[%s1462 + $0x18] sm:$0xff]
    %v1466 = vld [vmem:[%s1462 + $0x20] sm:$0xff]
    %v1467 = vld [vmem:[%s1462 + $0x30] sm:$0xff]
    %v1468 = vld [vmem:[%s1462 + $0x38] sm:$0xff]
    %v1469 = vld [vmem:[%s1462 + $0x48] sm:$0xff]
    %v1470 = vld [vmem:[%s1462 + $0x50] sm:$0xff]
    %v1471 = vld [vmem:[%s1462 + $0x60] sm:$0xff]
    %v1472 = vld [vmem:[%s1462 + $0x68] sm:$0xff]
    %v1473 = vld [vmem:[%s1462 + $0x78] sm:$0xff]
    %v1474 = vld [vmem:[%s1462 + $0x80] sm:$0xff]
    %v1475 = vld [vmem:[%s1462 + $0x90] sm:$0xff]
    %v1476 = vld [vmem:[%s1462 + $0x98] sm:$0xff]
    %v1477 = vld [vmem:[%s1462 + $0xa8] sm:$0xff]
    %v1478 = vld [vmem:[%s1462 + $0xb0] sm:$0xff]
    %v1479 = vld [vmem:[%s1462 + $0xc0] sm:$0xff]
    %v1480 = vld [vmem:[%s1462 + $0xc8] sm:$0xff]
    %v1481 = vld [vmem:[%s1462 + $0xd8] sm:$0xff]
    %v1482 = vld [vmem:[%s1462 + $0xe0] sm:$0xff]
    %v1483 = vld [vmem:[%s1462 + $0xf0] sm:$0xff]
    %v1484 = vld [vmem:[%s1462 + $0xf8] sm:$0xff]
    %v1485 = vld [vmem:[%s1462 + $0x108] sm:$0xff]
    %v1486 = vld [vmem:[%s1462 + $0x110] sm:$0xff]
    %v1487 = vld [vmem:[%s1462 + $0x120] sm:$0xff]
    %v1488 = vld [vmem:[%s1462 + $0x128] sm:$0xff]
    %v1489 = vld [vmem:[%s1462 + $0x138] sm:$0xff]
    %v1490 = vld [vmem:[%s1462 + $0x140] sm:$0xff]
    %v1491 = vld [vmem:[%s1462 + $0x150] sm:$0xff]
    %v1492 = vld [vmem:[%s1462 + $0x158] sm:$0xff]
    %v1493 = vld [vmem:[%s1462 + $0x168] sm:$0xff]
    %v1494 = vld [vmem:[%s1462 + $0x170] sm:$0xff]
    %v1495 = vld [vmem:[%s1462 + $0x1b0] sm:$0xff]
    %v1496 = vld [vmem:[%s1462 + $0x1b8] sm:$0xff]
    %v1497 = vld [vmem:[%s1462 + $0x1c8] sm:$0xff]
    %v1498 = vld [vmem:[%s1462 + $0x1d0] sm:$0xff]
    %v1499 = vld [vmem:[%s1462 + $0x1e0] sm:$0xff]
    %v1500 = vld [vmem:[%s1462 + $0x1e8] sm:$0xff]
    %v1501 = vld [vmem:[%s1462 + $0x1f8] sm:$0xff]
    %v1502 = vld [vmem:[%s1462 + $0x200] sm:$0xff]
    %v1503 = vld [vmem:[%s1462 + $0x210] sm:$0xff]
    %v1504 = vld [vmem:[%s1462 + $0x218] sm:$0xff]
    %v1505 = vld [vmem:[%s1462 + $0x228] sm:$0xff]
    %v1506 = vld [vmem:[%s1462 + $0x230] sm:$0xff]
    %v1507 = vld [vmem:[%s1462 + $0x240] sm:$0xff]
    %v1508 = vld [vmem:[%s1462 + $0x248] sm:$0xff]
    %v1509 = vld [vmem:[%s1462 + $0x258] sm:$0xff]
    %v1510 = vld [vmem:[%s1462 + $0x260] sm:$0xff]
    %v1511 = vld [vmem:[%s1462 + $0x270] sm:$0xff]
    %v1512 = vld [vmem:[%s1462 + $0x278] sm:$0xff]
    %v1513 = vld [vmem:[%s1462 + $0x288] sm:$0xff]
    %v1514 = vld [vmem:[%s1462 + $0x290] sm:$0xff]
    %v1515 = vld [vmem:[%s1462 + $0x2a0] sm:$0xff]
    %v1516 = vld [vmem:[%s1462 + $0x2a8] sm:$0xff]
    %v1517 = vld [vmem:[%s1462 + $0x2b8] sm:$0xff]
    %v1518 = vld [vmem:[%s1462 + $0x2c0] sm:$0xff]
    %v1519 = vld [vmem:[%s1462 + $0x2d0] sm:$0xff]
    %v1520 = vld [vmem:[%s1462 + $0x2d8] sm:$0xff]
    %v1521 = vld [vmem:[%s1462 + $0x2e8] sm:$0xff]
    %v1522 = vld [vmem:[%s1462 + $0x2f0] sm:$0xff]
    %v1523 = vld [vmem:[%s1462 + $0x300] sm:$0xff]
    %v1524 = vld [vmem:[%s1462 + $0x308] sm:$0xff]
    %v1525 = vld [vmem:[%s1462 + $0x318] sm:$0xff]
    %v1526 = vld [vmem:[%s1462 + $0x320] sm:$0xff]
    %v1527 = vperm.slane %v302, 6
    %v1528 = vmul.f32 %v1463, %v1527
    %v1529 = vmul.f32 %v1464, %v1527
    %v1530 = vmul.f32 %v1465, %v1527
    %v1531 = vmul.f32 %v1466, %v1527
    %v1532 = vmul.f32 %v1467, %v1527
    %v1533 = vmul.f32 %v1468, %v1527
    %v1534 = vmul.f32 %v1469, %v1527
    %v1535 = vmul.f32 %v1470, %v1527
    %v1536 = vmul.f32 %v1471, %v1527
    %v1537 = vmul.f32 %v1472, %v1527
    %v1538 = vmul.f32 %v1473, %v1527
    %v1539 = vmul.f32 %v1474, %v1527
    %v1540 = vmul.f32 %v1475, %v1527
    %v1541 = vmul.f32 %v1476, %v1527
    %v1542 = vmul.f32 %v1477, %v1527
    %v1543 = vmul.f32 %v1478, %v1527
    %v1544 = vmul.f32 %v1479, %v1527
    %v1545 = vmul.f32 %v1480, %v1527
    %v1546 = vmul.f32 %v1481, %v1527
    %v1547 = vmul.f32 %v1482, %v1527
    %v1548 = vmul.f32 %v1483, %v1527
    %v1549 = vmul.f32 %v1484, %v1527
    %v1550 = vmul.f32 %v1485, %v1527
    %v1551 = vmul.f32 %v1486, %v1527
    %v1552 = vmul.f32 %v1487, %v1527
    %v1553 = vmul.f32 %v1488, %v1527
    %v1554 = vmul.f32 %v1489, %v1527
    %v1555 = vmul.f32 %v1490, %v1527
    %v1556 = vmul.f32 %v1491, %v1527
    %v1557 = vmul.f32 %v1492, %v1527
    %v1558 = vmul.f32 %v1493, %v1527
    %v1559 = vmul.f32 %v1494, %v1527
    %v1560 = vmul.f32 %v1495, %v1527
    %v1561 = vmul.f32 %v1496, %v1527
    %v1562 = vmul.f32 %v1497, %v1527
    %v1563 = vmul.f32 %v1498, %v1527
    %v1564 = vmul.f32 %v1499, %v1527
    %v1565 = vmul.f32 %v1500, %v1527
    %v1566 = vmul.f32 %v1501, %v1527
    %v1567 = vmul.f32 %v1502, %v1527
    %v1568 = vmul.f32 %v1503, %v1527
    %v1569 = vmul.f32 %v1504, %v1527
    %v1570 = vmul.f32 %v1505, %v1527
    %v1571 = vmul.f32 %v1506, %v1527
    %v1572 = vmul.f32 %v1507, %v1527
    %v1573 = vmul.f32 %v1508, %v1527
    %v1574 = vmul.f32 %v1509, %v1527
    %v1575 = vmul.f32 %v1510, %v1527
    %v1576 = vmul.f32 %v1511, %v1527
    %v1577 = vmul.f32 %v1512, %v1527
    %v1578 = vmul.f32 %v1513, %v1527
    %v1579 = vmul.f32 %v1514, %v1527
    %v1580 = vmul.f32 %v1515, %v1527
    %v1581 = vmul.f32 %v1516, %v1527
    %v1582 = vmul.f32 %v1517, %v1527
    %v1583 = vmul.f32 %v1518, %v1527
    %v1584 = vmul.f32 %v1519, %v1527
    %v1585 = vmul.f32 %v1520, %v1527
    %v1586 = vmul.f32 %v1521, %v1527
    %v1587 = vmul.f32 %v1522, %v1527
    %v1588 = vmul.f32 %v1523, %v1527
    %v1589 = vmul.f32 %v1524, %v1527
    %v1590 = vmul.f32 %v1525, %v1527
    %v1591 = vmul.f32 %v1526, %v1527
    %v1592 = vadd.f32 %v1398, %v1528
    %v1593 = vadd.f32 %v1399, %v1529
    %v1594 = vadd.f32 %v1400, %v1530
    %v1595 = vadd.f32 %v1401, %v1531
    %v1596 = vadd.f32 %v1402, %v1532
    %v1597 = vadd.f32 %v1403, %v1533
    %v1598 = vadd.f32 %v1404, %v1534
    %v1599 = vadd.f32 %v1405, %v1535
    %v1600 = vadd.f32 %v1406, %v1536
    %v1601 = vadd.f32 %v1407, %v1537
    %v1602 = vadd.f32 %v1408, %v1538
    %v1603 = vadd.f32 %v1409, %v1539
    %v1604 = vadd.f32 %v1410, %v1540
    %v1605 = vadd.f32 %v1411, %v1541
    %v1606 = vadd.f32 %v1412, %v1542
    %v1607 = vadd.f32 %v1413, %v1543
    %v1608 = vadd.f32 %v1414, %v1544
    %v1609 = vadd.f32 %v1415, %v1545
    %v1610 = vadd.f32 %v1416, %v1546
    %v1611 = vadd.f32 %v1417, %v1547
    %v1612 = vadd.f32 %v1418, %v1548
    %v1613 = vadd.f32 %v1419, %v1549
    %v1614 = vadd.f32 %v1420, %v1550
    %v1615 = vadd.f32 %v1421, %v1551
    %v1616 = vadd.f32 %v1422, %v1552
    %v1617 = vadd.f32 %v1423, %v1553
    %v1618 = vadd.f32 %v1424, %v1554
    %v1619 = vadd.f32 %v1425, %v1555
    %v1620 = vadd.f32 %v1426, %v1556
    %v1621 = vadd.f32 %v1427, %v1557
    %v1622 = vadd.f32 %v1428, %v1558
    %v1623 = vadd.f32 %v1429, %v1559
    %v1624 = vadd.f32 %v1430, %v1560
    %v1625 = vadd.f32 %v1431, %v1561
    %v1626 = vadd.f32 %v1432, %v1562
    %v1627 = vadd.f32 %v1433, %v1563
    %v1628 = vadd.f32 %v1434, %v1564
    %v1629 = vadd.f32 %v1435, %v1565
    %v1630 = vadd.f32 %v1436, %v1566
    %v1631 = vadd.f32 %v1437, %v1567
    %v1632 = vadd.f32 %v1438, %v1568
    %v1633 = vadd.f32 %v1439, %v1569
    %v1634 = vadd.f32 %v1440, %v1570
    %v1635 = vadd.f32 %v1441, %v1571
    %v1636 = vadd.f32 %v1442, %v1572
    %v1637 = vadd.f32 %v1443, %v1573
    %v1638 = vadd.f32 %v1444, %v1574
    %v1639 = vadd.f32 %v1445, %v1575
    %v1640 = vadd.f32 %v1446, %v1576
    %v1641 = vadd.f32 %v1447, %v1577
    %v1642 = vadd.f32 %v1448, %v1578
    %v1643 = vadd.f32 %v1449, %v1579
    %v1644 = vadd.f32 %v1450, %v1580
    %v1645 = vadd.f32 %v1451, %v1581
    %v1646 = vadd.f32 %v1452, %v1582
    %v1647 = vadd.f32 %v1453, %v1583
    %v1648 = vadd.f32 %v1454, %v1584
    %v1649 = vadd.f32 %v1455, %v1585
    %v1650 = vadd.f32 %v1456, %v1586
    %v1651 = vadd.f32 %v1457, %v1587
    %v1652 = vadd.f32 %v1458, %v1588
    %v1653 = vadd.f32 %v1459, %v1589
    %v1654 = vadd.f32 %v1460, %v1590
    %v1655 = vadd.f32 %v1461, %v1591
    %v1656 = vld [vmem:[%s1462 + $0x1] sm:$0xff]
    %v1657 = vld [vmem:[%s1462 + $0x9] sm:$0xff]
    %v1658 = vld [vmem:[%s1462 + $0x19] sm:$0xff]
    %v1659 = vld [vmem:[%s1462 + $0x21] sm:$0xff]
    %v1660 = vld [vmem:[%s1462 + $0x31] sm:$0xff]
    %v1661 = vld [vmem:[%s1462 + $0x39] sm:$0xff]
    %v1662 = vld [vmem:[%s1462 + $0x49] sm:$0xff]
    %v1663 = vld [vmem:[%s1462 + $0x51] sm:$0xff]
    %v1664 = vld [vmem:[%s1462 + $0x61] sm:$0xff]
    %v1665 = vld [vmem:[%s1462 + $0x69] sm:$0xff]
    %v1666 = vld [vmem:[%s1462 + $0x79] sm:$0xff]
    %v1667 = vld [vmem:[%s1462 + $0x81] sm:$0xff]
    %v1668 = vld [vmem:[%s1462 + $0x91] sm:$0xff]
    %v1669 = vld [vmem:[%s1462 + $0x99] sm:$0xff]
    %v1670 = vld [vmem:[%s1462 + $0xa9] sm:$0xff]
    %v1671 = vld [vmem:[%s1462 + $0xb1] sm:$0xff]
    %v1672 = vld [vmem:[%s1462 + $0xc1] sm:$0xff]
    %v1673 = vld [vmem:[%s1462 + $0xc9] sm:$0xff]
    %v1674 = vld [vmem:[%s1462 + $0xd9] sm:$0xff]
    %v1675 = vld [vmem:[%s1462 + $0xe1] sm:$0xff]
    %v1676 = vld [vmem:[%s1462 + $0xf1] sm:$0xff]
    %v1677 = vld [vmem:[%s1462 + $0xf9] sm:$0xff]
    %v1678 = vld [vmem:[%s1462 + $0x109] sm:$0xff]
    %v1679 = vld [vmem:[%s1462 + $0x111] sm:$0xff]
    %v1680 = vld [vmem:[%s1462 + $0x121] sm:$0xff]
    %v1681 = vld [vmem:[%s1462 + $0x129] sm:$0xff]
    %v1682 = vld [vmem:[%s1462 + $0x139] sm:$0xff]
    %v1683 = vld [vmem:[%s1462 + $0x141] sm:$0xff]
    %v1684 = vld [vmem:[%s1462 + $0x151] sm:$0xff]
    %v1685 = vld [vmem:[%s1462 + $0x159] sm:$0xff]
    %v1686 = vld [vmem:[%s1462 + $0x169] sm:$0xff]
    %v1687 = vld [vmem:[%s1462 + $0x171] sm:$0xff]
    %v1688 = vld [vmem:[%s1462 + $0x1b1] sm:$0xff]
    %v1689 = vld [vmem:[%s1462 + $0x1b9] sm:$0xff]
    %v1690 = vld [vmem:[%s1462 + $0x1c9] sm:$0xff]
    %v1691 = vld [vmem:[%s1462 + $0x1d1] sm:$0xff]
    %v1692 = vld [vmem:[%s1462 + $0x1e1] sm:$0xff]
    %v1693 = vld [vmem:[%s1462 + $0x1e9] sm:$0xff]
    %v1694 = vld [vmem:[%s1462 + $0x1f9] sm:$0xff]
    %v1695 = vld [vmem:[%s1462 + $0x201] sm:$0xff]
    %v1696 = vld [vmem:[%s1462 + $0x211] sm:$0xff]
    %v1697 = vld [vmem:[%s1462 + $0x219] sm:$0xff]
    %v1698 = vld [vmem:[%s1462 + $0x229] sm:$0xff]
    %v1699 = vld [vmem:[%s1462 + $0x231] sm:$0xff]
    %v1700 = vld [vmem:[%s1462 + $0x241] sm:$0xff]
    %v1701 = vld [vmem:[%s1462 + $0x249] sm:$0xff]
    %v1702 = vld [vmem:[%s1462 + $0x259] sm:$0xff]
    %v1703 = vld [vmem:[%s1462 + $0x261] sm:$0xff]
    %v1704 = vld [vmem:[%s1462 + $0x271] sm:$0xff]
    %v1705 = vld [vmem:[%s1462 + $0x279] sm:$0xff]
    %v1706 = vld [vmem:[%s1462 + $0x289] sm:$0xff]
    %v1707 = vld [vmem:[%s1462 + $0x291] sm:$0xff]
    %v1708 = vld [vmem:[%s1462 + $0x2a1] sm:$0xff]
    %v1709 = vld [vmem:[%s1462 + $0x2a9] sm:$0xff]
    %v1710 = vld [vmem:[%s1462 + $0x2b9] sm:$0xff]
    %v1711 = vld [vmem:[%s1462 + $0x2c1] sm:$0xff]
    %v1712 = vld [vmem:[%s1462 + $0x2d1] sm:$0xff]
    %v1713 = vld [vmem:[%s1462 + $0x2d9] sm:$0xff]
    %v1714 = vld [vmem:[%s1462 + $0x2e9] sm:$0xff]
    %v1715 = vld [vmem:[%s1462 + $0x2f1] sm:$0xff]
    %v1716 = vld [vmem:[%s1462 + $0x301] sm:$0xff]
    %v1717 = vld [vmem:[%s1462 + $0x309] sm:$0xff]
    %v1718 = vld [vmem:[%s1462 + $0x319] sm:$0xff]
    %v1719 = vld [vmem:[%s1462 + $0x321] sm:$0xff]
    %v1720 = vperm.slane %v302, 7
    %v1721 = vmul.f32 %v1656, %v1720
    %v1722 = vmul.f32 %v1657, %v1720
    %v1723 = vmul.f32 %v1658, %v1720
    %v1724 = vmul.f32 %v1659, %v1720
    %v1725 = vmul.f32 %v1660, %v1720
    %v1726 = vmul.f32 %v1661, %v1720
    %v1727 = vmul.f32 %v1662, %v1720
    %v1728 = vmul.f32 %v1663, %v1720
    %v1729 = vmul.f32 %v1664, %v1720
    %v1730 = vmul.f32 %v1665, %v1720
    %v1731 = vmul.f32 %v1666, %v1720
    %v1732 = vmul.f32 %v1667, %v1720
    %v1733 = vmul.f32 %v1668, %v1720
    %v1734 = vmul.f32 %v1669, %v1720
    %v1735 = vmul.f32 %v1670, %v1720
    %v1736 = vmul.f32 %v1671, %v1720
    %v1737 = vmul.f32 %v1672, %v1720
    %v1738 = vmul.f32 %v1673, %v1720
    %v1739 = vmul.f32 %v1674, %v1720
    %v1740 = vmul.f32 %v1675, %v1720
    %v1741 = vmul.f32 %v1676, %v1720
    %v1742 = vmul.f32 %v1677, %v1720
    %v1743 = vmul.f32 %v1678, %v1720
    %v1744 = vmul.f32 %v1679, %v1720
    %v1745 = vmul.f32 %v1680, %v1720
    %v1746 = vmul.f32 %v1681, %v1720
    %v1747 = vmul.f32 %v1682, %v1720
    %v1748 = vmul.f32 %v1683, %v1720
    %v1749 = vmul.f32 %v1684, %v1720
    %v1750 = vmul.f32 %v1685, %v1720
    %v1751 = vmul.f32 %v1686, %v1720
    %v1752 = vmul.f32 %v1687, %v1720
    %v1753 = vmul.f32 %v1688, %v1720
    %v1754 = vmul.f32 %v1689, %v1720
    %v1755 = vmul.f32 %v1690, %v1720
    %v1756 = vmul.f32 %v1691, %v1720
    %v1757 = vmul.f32 %v1692, %v1720
    %v1758 = vmul.f32 %v1693, %v1720
    %v1759 = vmul.f32 %v1694, %v1720
    %v1760 = vmul.f32 %v1695, %v1720
    %v1761 = vmul.f32 %v1696, %v1720
    %v1762 = vmul.f32 %v1697, %v1720
    %v1763 = vmul.f32 %v1698, %v1720
    %v1764 = vmul.f32 %v1699, %v1720
    %v1765 = vmul.f32 %v1700, %v1720
    %v1766 = vmul.f32 %v1701, %v1720
    %v1767 = vmul.f32 %v1702, %v1720
    %v1768 = vmul.f32 %v1703, %v1720
    %v1769 = vmul.f32 %v1704, %v1720
    %v1770 = vmul.f32 %v1705, %v1720
    %v1771 = vmul.f32 %v1706, %v1720
    %v1772 = vmul.f32 %v1707, %v1720
    %v1773 = vmul.f32 %v1708, %v1720
    %v1774 = vmul.f32 %v1709, %v1720
    %v1775 = vmul.f32 %v1710, %v1720
    %v1776 = vmul.f32 %v1711, %v1720
    %v1777 = vmul.f32 %v1712, %v1720
    %v1778 = vmul.f32 %v1713, %v1720
    %v1779 = vmul.f32 %v1714, %v1720
    %v1780 = vmul.f32 %v1715, %v1720
    %v1781 = vmul.f32 %v1716, %v1720
    %v1782 = vmul.f32 %v1717, %v1720
    %v1783 = vmul.f32 %v1718, %v1720
    %v1784 = vmul.f32 %v1719, %v1720
    %v1785 = vadd.f32 %v1592, %v1721
    %v1786 = vadd.f32 %v1593, %v1722
    %v1787 = vadd.f32 %v1594, %v1723
    %v1788 = vadd.f32 %v1595, %v1724
    %v1789 = vadd.f32 %v1596, %v1725
    %v1790 = vadd.f32 %v1597, %v1726
    %v1791 = vadd.f32 %v1598, %v1727
    %v1792 = vadd.f32 %v1599, %v1728
    %v1793 = vadd.f32 %v1600, %v1729
    %v1794 = vadd.f32 %v1601, %v1730
    %v1795 = vadd.f32 %v1602, %v1731
    %v1796 = vadd.f32 %v1603, %v1732
    %v1797 = vadd.f32 %v1604, %v1733
    %v1798 = vadd.f32 %v1605, %v1734
    %v1799 = vadd.f32 %v1606, %v1735
    %v1800 = vadd.f32 %v1607, %v1736
    %v1801 = vadd.f32 %v1608, %v1737
    %v1802 = vadd.f32 %v1609, %v1738
    %v1803 = vadd.f32 %v1610, %v1739
    %v1804 = vadd.f32 %v1611, %v1740
    %v1805 = vadd.f32 %v1612, %v1741
    %v1806 = vadd.f32 %v1613, %v1742
    %v1807 = vadd.f32 %v1614, %v1743
    %v1808 = vadd.f32 %v1615, %v1744
    %v1809 = vadd.f32 %v1616, %v1745
    %v1810 = vadd.f32 %v1617, %v1746
    %v1811 = vadd.f32 %v1618, %v1747
    %v1812 = vadd.f32 %v1619, %v1748
    %v1813 = vadd.f32 %v1620, %v1749
    %v1814 = vadd.f32 %v1621, %v1750
    %v1815 = vadd.f32 %v1622, %v1751
    %v1816 = vadd.f32 %v1623, %v1752
    %v1817 = vadd.f32 %v1624, %v1753
    %v1818 = vadd.f32 %v1625, %v1754
    %v1819 = vadd.f32 %v1626, %v1755
    %v1820 = vadd.f32 %v1627, %v1756
    %v1821 = vadd.f32 %v1628, %v1757
    %v1822 = vadd.f32 %v1629, %v1758
    %v1823 = vadd.f32 %v1630, %v1759
    %v1824 = vadd.f32 %v1631, %v1760
    %v1825 = vadd.f32 %v1632, %v1761
    %v1826 = vadd.f32 %v1633, %v1762
    %v1827 = vadd.f32 %v1634, %v1763
    %v1828 = vadd.f32 %v1635, %v1764
    %v1829 = vadd.f32 %v1636, %v1765
    %v1830 = vadd.f32 %v1637, %v1766
    %v1831 = vadd.f32 %v1638, %v1767
    %v1832 = vadd.f32 %v1639, %v1768
    %v1833 = vadd.f32 %v1640, %v1769
    %v1834 = vadd.f32 %v1641, %v1770
    %v1835 = vadd.f32 %v1642, %v1771
    %v1836 = vadd.f32 %v1643, %v1772
    %v1837 = vadd.f32 %v1644, %v1773
    %v1838 = vadd.f32 %v1645, %v1774
    %v1839 = vadd.f32 %v1646, %v1775
    %v1840 = vadd.f32 %v1647, %v1776
    %v1841 = vadd.f32 %v1648, %v1777
    %v1842 = vadd.f32 %v1649, %v1778
    %v1843 = vadd.f32 %v1650, %v1779
    %v1844 = vadd.f32 %v1651, %v1780
    %v1845 = vadd.f32 %v1652, %v1781
    %v1846 = vadd.f32 %v1653, %v1782
    %v1847 = vadd.f32 %v1654, %v1783
    %v1848 = vadd.f32 %v1655, %v1784
    %v1849 = vld [vmem:[%s1462 + $0x2] sm:$0xff]
    %v1850 = vld [vmem:[%s1462 + $0xa] sm:$0xff]
    %v1851 = vld [vmem:[%s1462 + $0x1a] sm:$0xff]
    %v1852 = vld [vmem:[%s1462 + $0x22] sm:$0xff]
    %v1853 = vld [vmem:[%s1462 + $0x32] sm:$0xff]
    %v1854 = vld [vmem:[%s1462 + $0x3a] sm:$0xff]
    %v1855 = vld [vmem:[%s1462 + $0x4a] sm:$0xff]
    %v1856 = vld [vmem:[%s1462 + $0x52] sm:$0xff]
    %v1857 = vld [vmem:[%s1462 + $0x62] sm:$0xff]
    %v1858 = vld [vmem:[%s1462 + $0x6a] sm:$0xff]
    %v1859 = vld [vmem:[%s1462 + $0x7a] sm:$0xff]
    %v1860 = vld [vmem:[%s1462 + $0x82] sm:$0xff]
    %v1861 = vld [vmem:[%s1462 + $0x92] sm:$0xff]
    %v1862 = vld [vmem:[%s1462 + $0x9a] sm:$0xff]
    %v1863 = vld [vmem:[%s1462 + $0xaa] sm:$0xff]
    %v1864 = vld [vmem:[%s1462 + $0xb2] sm:$0xff]
    %v1865 = vld [vmem:[%s1462 + $0xc2] sm:$0xff]
    %v1866 = vld [vmem:[%s1462 + $0xca] sm:$0xff]
    %v1867 = vld [vmem:[%s1462 + $0xda] sm:$0xff]
    %v1868 = vld [vmem:[%s1462 + $0xe2] sm:$0xff]
    %v1869 = vld [vmem:[%s1462 + $0xf2] sm:$0xff]
    %v1870 = vld [vmem:[%s1462 + $0xfa] sm:$0xff]
    %v1871 = vld [vmem:[%s1462 + $0x10a] sm:$0xff]
    %v1872 = vld [vmem:[%s1462 + $0x112] sm:$0xff]
    %v1873 = vld [vmem:[%s1462 + $0x122] sm:$0xff]
    %v1874 = vld [vmem:[%s1462 + $0x12a] sm:$0xff]
    %v1875 = vld [vmem:[%s1462 + $0x13a] sm:$0xff]
    %v1876 = vld [vmem:[%s1462 + $0x142] sm:$0xff]
    %v1877 = vld [vmem:[%s1462 + $0x152] sm:$0xff]
    %v1878 = vld [vmem:[%s1462 + $0x15a] sm:$0xff]
    %v1879 = vld [vmem:[%s1462 + $0x16a] sm:$0xff]
    %v1880 = vld [vmem:[%s1462 + $0x172] sm:$0xff]
    %v1881 = vld [vmem:[%s1462 + $0x1b2] sm:$0xff]
    %v1882 = vld [vmem:[%s1462 + $0x1ba] sm:$0xff]
    %v1883 = vld [vmem:[%s1462 + $0x1ca] sm:$0xff]
    %v1884 = vld [vmem:[%s1462 + $0x1d2] sm:$0xff]
    %v1885 = vld [vmem:[%s1462 + $0x1e2] sm:$0xff]
    %v1886 = vld [vmem:[%s1462 + $0x1ea] sm:$0xff]
    %v1887 = vld [vmem:[%s1462 + $0x1fa] sm:$0xff]
    %v1888 = vld [vmem:[%s1462 + $0x202] sm:$0xff]
    %v1889 = vld [vmem:[%s1462 + $0x212] sm:$0xff]
    %v1890 = vld [vmem:[%s1462 + $0x21a] sm:$0xff]
    %v1891 = vld [vmem:[%s1462 + $0x22a] sm:$0xff]
    %v1892 = vld [vmem:[%s1462 + $0x232] sm:$0xff]
    %v1893 = vld [vmem:[%s1462 + $0x242] sm:$0xff]
    %v1894 = vld [vmem:[%s1462 + $0x24a] sm:$0xff]
    %v1895 = vld [vmem:[%s1462 + $0x25a] sm:$0xff]
    %v1896 = vld [vmem:[%s1462 + $0x262] sm:$0xff]
    %v1897 = vld [vmem:[%s1462 + $0x272] sm:$0xff]
    %v1898 = vld [vmem:[%s1462 + $0x27a] sm:$0xff]
    %v1899 = vld [vmem:[%s1462 + $0x28a] sm:$0xff]
    %v1900 = vld [vmem:[%s1462 + $0x292] sm:$0xff]
    %v1901 = vld [vmem:[%s1462 + $0x2a2] sm:$0xff]
    %v1902 = vld [vmem:[%s1462 + $0x2aa] sm:$0xff]
    %v1903 = vld [vmem:[%s1462 + $0x2ba] sm:$0xff]
    %v1904 = vld [vmem:[%s1462 + $0x2c2] sm:$0xff]
    %v1905 = vld [vmem:[%s1462 + $0x2d2] sm:$0xff]
    %v1906 = vld [vmem:[%s1462 + $0x2da] sm:$0xff]
    %v1907 = vld [vmem:[%s1462 + $0x2ea] sm:$0xff]
    %v1908 = vld [vmem:[%s1462 + $0x2f2] sm:$0xff]
    %v1909 = vld [vmem:[%s1462 + $0x302] sm:$0xff]
    %v1910 = vld [vmem:[%s1462 + $0x30a] sm:$0xff]
    %v1911 = vld [vmem:[%s1462 + $0x31a] sm:$0xff]
    %v1912 = vld [vmem:[%s1462 + $0x322] sm:$0xff]
    %v1913 = vperm.slane %v303, 0
    %v1914 = vmul.f32 %v1849, %v1913
    %v1915 = vmul.f32 %v1850, %v1913
    %v1916 = vmul.f32 %v1851, %v1913
    %v1917 = vmul.f32 %v1852, %v1913
    %v1918 = vmul.f32 %v1853, %v1913
    %v1919 = vmul.f32 %v1854, %v1913
    %v1920 = vmul.f32 %v1855, %v1913
    %v1921 = vmul.f32 %v1856, %v1913
    %v1922 = vmul.f32 %v1857, %v1913
    %v1923 = vmul.f32 %v1858, %v1913
    %v1924 = vmul.f32 %v1859, %v1913
    %v1925 = vmul.f32 %v1860, %v1913
    %v1926 = vmul.f32 %v1861, %v1913
    %v1927 = vmul.f32 %v1862, %v1913
    %v1928 = vmul.f32 %v1863, %v1913
    %v1929 = vmul.f32 %v1864, %v1913
    %v1930 = vmul.f32 %v1865, %v1913
    %v1931 = vmul.f32 %v1866, %v1913
    %v1932 = vmul.f32 %v1867, %v1913
    %v1933 = vmul.f32 %v1868, %v1913
    %v1934 = vmul.f32 %v1869, %v1913
    %v1935 = vmul.f32 %v1870, %v1913
    %v1936 = vmul.f32 %v1871, %v1913
    %v1937 = vmul.f32 %v1872, %v1913
    %v1938 = vmul.f32 %v1873, %v1913
    %v1939 = vmul.f32 %v1874, %v1913
    %v1940 = vmul.f32 %v1875, %v1913
    %v1941 = vmul.f32 %v1876, %v1913
    %v1942 = vmul.f32 %v1877, %v1913
    %v1943 = vmul.f32 %v1878, %v1913
    %v1944 = vmul.f32 %v1879, %v1913
    %v1945 = vmul.f32 %v1880, %v1913
    %v1946 = vmul.f32 %v1881, %v1913
    %v1947 = vmul.f32 %v1882, %v1913
    %v1948 = vmul.f32 %v1883, %v1913
    %v1949 = vmul.f32 %v1884, %v1913
    %v1950 = vmul.f32 %v1885, %v1913
    %v1951 = vmul.f32 %v1886, %v1913
    %v1952 = vmul.f32 %v1887, %v1913
    %v1953 = vmul.f32 %v1888, %v1913
    %v1954 = vmul.f32 %v1889, %v1913
    %v1955 = vmul.f32 %v1890, %v1913
    %v1956 = vmul.f32 %v1891, %v1913
    %v1957 = vmul.f32 %v1892, %v1913
    %v1958 = vmul.f32 %v1893, %v1913
    %v1959 = vmul.f32 %v1894, %v1913
    %v1960 = vmul.f32 %v1895, %v1913
    %v1961 = vmul.f32 %v1896, %v1913
    %v1962 = vmul.f32 %v1897, %v1913
    %v1963 = vmul.f32 %v1898, %v1913
    %v1964 = vmul.f32 %v1899, %v1913
    %v1965 = vmul.f32 %v1900, %v1913
    %v1966 = vmul.f32 %v1901, %v1913
    %v1967 = vmul.f32 %v1902, %v1913
    %v1968 = vmul.f32 %v1903, %v1913
    %v1969 = vmul.f32 %v1904, %v1913
    %v1970 = vmul.f32 %v1905, %v1913
    %v1971 = vmul.f32 %v1906, %v1913
    %v1972 = vmul.f32 %v1907, %v1913
    %v1973 = vmul.f32 %v1908, %v1913
    %v1974 = vmul.f32 %v1909, %v1913
    %v1975 = vmul.f32 %v1910, %v1913
    %v1976 = vmul.f32 %v1911, %v1913
    %v1977 = vmul.f32 %v1912, %v1913
    %v1978 = vadd.f32 %v1785, %v1914
    %v1979 = vadd.f32 %v1786, %v1915
    %v1980 = vadd.f32 %v1787, %v1916
    %v1981 = vadd.f32 %v1788, %v1917
    %v1982 = vadd.f32 %v1789, %v1918
    %v1983 = vadd.f32 %v1790, %v1919
    %v1984 = vadd.f32 %v1791, %v1920
    %v1985 = vadd.f32 %v1792, %v1921
    %v1986 = vadd.f32 %v1793, %v1922
    %v1987 = vadd.f32 %v1794, %v1923
    %v1988 = vadd.f32 %v1795, %v1924
    %v1989 = vadd.f32 %v1796, %v1925
    %v1990 = vadd.f32 %v1797, %v1926
    %v1991 = vadd.f32 %v1798, %v1927
    %v1992 = vadd.f32 %v1799, %v1928
    %v1993 = vadd.f32 %v1800, %v1929
    %v1994 = vadd.f32 %v1801, %v1930
    %v1995 = vadd.f32 %v1802, %v1931
    %v1996 = vadd.f32 %v1803, %v1932
    %v1997 = vadd.f32 %v1804, %v1933
    %v1998 = vadd.f32 %v1805, %v1934
    %v1999 = vadd.f32 %v1806, %v1935
    %v2000 = vadd.f32 %v1807, %v1936
    %v2001 = vadd.f32 %v1808, %v1937
    %v2002 = vadd.f32 %v1809, %v1938
    %v2003 = vadd.f32 %v1810, %v1939
    %v2004 = vadd.f32 %v1811, %v1940
    %v2005 = vadd.f32 %v1812, %v1941
    %v2006 = vadd.f32 %v1813, %v1942
    %v2007 = vadd.f32 %v1814, %v1943
    %v2008 = vadd.f32 %v1815, %v1944
    %v2009 = vadd.f32 %v1816, %v1945
    %v2010 = vadd.f32 %v1817, %v1946
    %v2011 = vadd.f32 %v1818, %v1947
    %v2012 = vadd.f32 %v1819, %v1948
    %v2013 = vadd.f32 %v1820, %v1949
    %v2014 = vadd.f32 %v1821, %v1950
    %v2015 = vadd.f32 %v1822, %v1951
    %v2016 = vadd.f32 %v1823, %v1952
    %v2017 = vadd.f32 %v1824, %v1953
    %v2018 = vadd.f32 %v1825, %v1954
    %v2019 = vadd.f32 %v1826, %v1955
    %v2020 = vadd.f32 %v1827, %v1956
    %v2021 = vadd.f32 %v1828, %v1957
    %v2022 = vadd.f32 %v1829, %v1958
    %v2023 = vadd.f32 %v1830, %v1959
    %v2024 = vadd.f32 %v1831, %v1960
    %v2025 = vadd.f32 %v1832, %v1961
    %v2026 = vadd.f32 %v1833, %v1962
    %v2027 = vadd.f32 %v1834, %v1963
    %v2028 = vadd.f32 %v1835, %v1964
    %v2029 = vadd.f32 %v1836, %v1965
    %v2030 = vadd.f32 %v1837, %v1966
    %v2031 = vadd.f32 %v1838, %v1967
    %v2032 = vadd.f32 %v1839, %v1968
    %v2033 = vadd.f32 %v1840, %v1969
    %v2034 = vadd.f32 %v1841, %v1970
    %v2035 = vadd.f32 %v1842, %v1971
    %v2036 = vadd.f32 %v1843, %v1972
    %v2037 = vadd.f32 %v1844, %v1973
    %v2038 = vadd.f32 %v1845, %v1974
    %v2039 = vadd.f32 %v1846, %v1975
    %v2040 = vadd.f32 %v1847, %v1976
    %v2041 = vadd.f32 %v1848, %v1977
    %v2042 = vld [vmem:[#allocation8] sm:$0xff]
    %v2043 = vld [vmem:[#allocation8 + $0x8] sm:$0xff]
    %v2044 = vld [vmem:[#allocation8 + $0x10] sm:$0xff]
    %v2045 = vld [vmem:[#allocation8 + $0x18] sm:$0xff]
    %v2046 = vld [vmem:[#allocation8 + $0x20] sm:$0xff]
    %v2047 = vld [vmem:[#allocation8 + $0x28] sm:$0xff]
    %v2048 = vld [vmem:[#allocation8 + $0x30] sm:$0xff]
    %v2049 = vld [vmem:[#allocation8 + $0x38] sm:$0xff]
    %v2050 = vld [vmem:[#allocation8 + $0x40] sm:$0xff]
    %v2051 = vld [vmem:[#allocation8 + $0x48] sm:$0xff]
    %v2052 = vld [vmem:[#allocation8 + $0x50] sm:$0xff]
    %v2053 = vld [vmem:[#allocation8 + $0x58] sm:$0xff]
    %v2054 = vld [vmem:[#allocation8 + $0x60] sm:$0xff]
    %v2055 = vld [vmem:[#allocation8 + $0x68] sm:$0xff]
    %v2056 = vld [vmem:[#allocation8 + $0x70] sm:$0xff]
    %v2057 = vld [vmem:[#allocation8 + $0x78] sm:$0xff]
    %v2058 = vld [vmem:[%s3] sm:$0x1]
    %v2060 = vperm.slane %v2058, 0
    %2062 = vmatpush.msra.mxu0 %v2057
    %2063 = vmatpush.msra.mxu0 %v2056
    %2064 = vmatpush.msra.mxu0 %v2055
    %2065 = vmatpush.msra.mxu0 %v2054
    %2066 = vmatpush.msra.mxu0 %v2053
    %2067 = vmatpush.msra.mxu0 %v2052
    %2068 = vmatpush.msra.mxu0 %v2051
    %2069 = vmatpush.msra.mxu0 %v2050
    %2070 = vmatpush.msra.mxu0 %v2049
    %2071 = vmatpush.msra.mxu0 %v2048
    %2072 = vmatpush.msra.mxu0 %v2047
    %2073 = vmatpush.msra.mxu0 %v2046
    %2074 = vmatpush.msra.mxu0 %v2045
    %2075 = vmatpush.msra.mxu0 %v2044
    %2076 = vmatpush.msra.mxu0 %v2043
    %2077 = vmatpush.msra.mxu0 %v2042
    %2078 = vmatmul.f32.gmra.mxu0 %v1978
    %v2079 = vpop.f32.mrf.mxu0
    %v2080 = vadd.f32 %v2060, %v2079
    %2081 = vmatmul.f32.gmra.mxu0 %v1979
    %v2082 = vpop.f32.mrf.mxu0
    %v2083 = vadd.f32 %v2060, %v2082
    %2084 = vmatmul.f32.gmra.mxu0 %v1980
    %v2085 = vpop.f32.mrf.mxu0
    %v2086 = vadd.f32 %v2060, %v2085
    %2087 = vmatmul.f32.gmra.mxu0 %v1981
    %v2088 = vpop.f32.mrf.mxu0
    %v2089 = vadd.f32 %v2060, %v2088
    %2090 = vmatmul.f32.gmra.mxu0 %v1982
    %v2091 = vpop.f32.mrf.mxu0
    %v2092 = vadd.f32 %v2060, %v2091
    %2093 = vmatmul.f32.gmra.mxu0 %v1983
    %v2094 = vpop.f32.mrf.mxu0
    %v2095 = vadd.f32 %v2060, %v2094
    %2096 = vmatmul.f32.gmra.mxu0 %v1984
    %v2097 = vpop.f32.mrf.mxu0
    %v2098 = vadd.f32 %v2060, %v2097
    %2099 = vmatmul.f32.gmra.mxu0 %v1985
    %v2100 = vpop.f32.mrf.mxu0
    %v2101 = vadd.f32 %v2060, %v2100
    %2102 = vmatmul.f32.gmra.mxu0 %v1986
    %v2103 = vpop.f32.mrf.mxu0
    %v2104 = vadd.f32 %v2060, %v2103
    %2105 = vmatmul.f32.gmra.mxu0 %v1987
    %v2106 = vpop.f32.mrf.mxu0
    %v2107 = vadd.f32 %v2060, %v2106
    %2108 = vmatmul.f32.gmra.mxu0 %v1988
    %v2109 = vpop.f32.mrf.mxu0
    %v2110 = vadd.f32 %v2060, %v2109
    %2111 = vmatmul.f32.gmra.mxu0 %v1989
    %v2112 = vpop.f32.mrf.mxu0
    %v2113 = vadd.f32 %v2060, %v2112
    %2114 = vmatmul.f32.gmra.mxu0 %v1990
    %v2115 = vpop.f32.mrf.mxu0
    %v2116 = vadd.f32 %v2060, %v2115
    %2117 = vmatmul.f32.gmra.mxu0 %v1991
    %v2118 = vpop.f32.mrf.mxu0
    %v2119 = vadd.f32 %v2060, %v2118
    %2120 = vmatmul.f32.gmra.mxu0 %v1992
    %v2121 = vpop.f32.mrf.mxu0
    %v2122 = vadd.f32 %v2060, %v2121
    %2123 = vmatmul.f32.gmra.mxu0 %v1993
    %v2124 = vpop.f32.mrf.mxu0
    %v2125 = vadd.f32 %v2060, %v2124
    %2126 = vmatmul.f32.gmra.mxu0 %v1994
    %v2127 = vpop.f32.mrf.mxu0
    %v2128 = vadd.f32 %v2060, %v2127
    %2129 = vmatmul.f32.gmra.mxu0 %v1995
    %v2130 = vpop.f32.mrf.mxu0
    %v2131 = vadd.f32 %v2060, %v2130
    %2132 = vmatmul.f32.gmra.mxu0 %v1996
    %v2133 = vpop.f32.mrf.mxu0
    %v2134 = vadd.f32 %v2060, %v2133
    %2135 = vmatmul.f32.gmra.mxu0 %v1997
    %v2136 = vpop.f32.mrf.mxu0
    %v2137 = vadd.f32 %v2060, %v2136
    %2138 = vmatmul.f32.gmra.mxu0 %v1998
    %v2139 = vpop.f32.mrf.mxu0
    %v2140 = vadd.f32 %v2060, %v2139
    %2141 = vmatmul.f32.gmra.mxu0 %v1999
    %v2142 = vpop.f32.mrf.mxu0
    %v2143 = vadd.f32 %v2060, %v2142
    %2144 = vmatmul.f32.gmra.mxu0 %v2000
    %v2145 = vpop.f32.mrf.mxu0
    %v2146 = vadd.f32 %v2060, %v2145
    %2147 = vmatmul.f32.gmra.mxu0 %v2001
    %v2148 = vpop.f32.mrf.mxu0
    %v2149 = vadd.f32 %v2060, %v2148
    %2150 = vmatmul.f32.gmra.mxu0 %v2002
    %v2151 = vpop.f32.mrf.mxu0
    %v2152 = vadd.f32 %v2060, %v2151
    %2153 = vmatmul.f32.gmra.mxu0 %v2003
    %v2154 = vpop.f32.mrf.mxu0
    %v2155 = vadd.f32 %v2060, %v2154
    %2156 = vmatmul.f32.gmra.mxu0 %v2004
    %v2157 = vpop.f32.mrf.mxu0
    %v2158 = vadd.f32 %v2060, %v2157
    %2159 = vmatmul.f32.gmra.mxu0 %v2005
    %v2160 = vpop.f32.mrf.mxu0
    %v2161 = vadd.f32 %v2060, %v2160
    %2162 = vmatmul.f32.gmra.mxu0 %v2006
    %v2163 = vpop.f32.mrf.mxu0
    %v2164 = vadd.f32 %v2060, %v2163
    %2165 = vmatmul.f32.gmra.mxu0 %v2007
    %v2166 = vpop.f32.mrf.mxu0
    %v2167 = vadd.f32 %v2060, %v2166
    %2168 = vmatmul.f32.gmra.mxu0 %v2008
    %v2169 = vpop.f32.mrf.mxu0
    %v2170 = vadd.f32 %v2060, %v2169
    %2171 = vmatmul.f32.gmra.mxu0 %v2009
    %v2172 = vpop.f32.mrf.mxu0
    %v2173 = vadd.f32 %v2060, %v2172
    %2174 = vmatmul.f32.gmra.mxu0 %v2010
    %v2175 = vpop.f32.mrf.mxu0
    %v2176 = vadd.f32 %v2060, %v2175
    %2177 = vmatmul.f32.gmra.mxu0 %v2011
    %v2178 = vpop.f32.mrf.mxu0
    %v2179 = vadd.f32 %v2060, %v2178
    %2180 = vmatmul.f32.gmra.mxu0 %v2012
    %v2181 = vpop.f32.mrf.mxu0
    %v2182 = vadd.f32 %v2060, %v2181
    %2183 = vmatmul.f32.gmra.mxu0 %v2013
    %v2184 = vpop.f32.mrf.mxu0
    %v2185 = vadd.f32 %v2060, %v2184
    %2186 = vmatmul.f32.gmra.mxu0 %v2014
    %v2187 = vpop.f32.mrf.mxu0
    %v2188 = vadd.f32 %v2060, %v2187
    %2189 = vmatmul.f32.gmra.mxu0 %v2015
    %v2190 = vpop.f32.mrf.mxu0
    %v2191 = vadd.f32 %v2060, %v2190
    %2192 = vmatmul.f32.gmra.mxu0 %v2016
    %v2193 = vpop.f32.mrf.mxu0
    %v2194 = vadd.f32 %v2060, %v2193
    %2195 = vmatmul.f32.gmra.mxu0 %v2017
    %v2196 = vpop.f32.mrf.mxu0
    %v2197 = vadd.f32 %v2060, %v2196
    %2198 = vmatmul.f32.gmra.mxu0 %v2018
    %v2199 = vpop.f32.mrf.mxu0
    %v2200 = vadd.f32 %v2060, %v2199
    %2201 = vmatmul.f32.gmra.mxu0 %v2019
    %v2202 = vpop.f32.mrf.mxu0
    %v2203 = vadd.f32 %v2060, %v2202
    %2204 = vmatmul.f32.gmra.mxu0 %v2020
    %v2205 = vpop.f32.mrf.mxu0
    %v2206 = vadd.f32 %v2060, %v2205
    %2207 = vmatmul.f32.gmra.mxu0 %v2021
    %v2208 = vpop.f32.mrf.mxu0
    %v2209 = vadd.f32 %v2060, %v2208
    %2210 = vmatmul.f32.gmra.mxu0 %v2022
    %v2211 = vpop.f32.mrf.mxu0
    %v2212 = vadd.f32 %v2060, %v2211
    %2213 = vmatmul.f32.gmra.mxu0 %v2023
    %v2214 = vpop.f32.mrf.mxu0
    %v2215 = vadd.f32 %v2060, %v2214
    %2216 = vmatmul.f32.gmra.mxu0 %v2024
    %v2217 = vpop.f32.mrf.mxu0
    %v2218 = vadd.f32 %v2060, %v2217
    %2219 = vmatmul.f32.gmra.mxu0 %v2025
    %v2220 = vpop.f32.mrf.mxu0
    %v2221 = vadd.f32 %v2060, %v2220
    %2222 = vmatmul.f32.gmra.mxu0 %v2026
    %v2223 = vpop.f32.mrf.mxu0
    %v2224 = vadd.f32 %v2060, %v2223
    %2225 = vmatmul.f32.gmra.mxu0 %v2027
    %v2226 = vpop.f32.mrf.mxu0
    %v2227 = vadd.f32 %v2060, %v2226
    %2228 = vmatmul.f32.gmra.mxu0 %v2028
    %v2229 = vpop.f32.mrf.mxu0
    %v2230 = vadd.f32 %v2060, %v2229
    %2231 = vmatmul.f32.gmra.mxu0 %v2029
    %v2232 = vpop.f32.mrf.mxu0
    %v2233 = vadd.f32 %v2060, %v2232
    %2234 = vmatmul.f32.gmra.mxu0 %v2030
    %v2235 = vpop.f32.mrf.mxu0
    %v2236 = vadd.f32 %v2060, %v2235
    %2237 = vmatmul.f32.gmra.mxu0 %v2031
    %v2238 = vpop.f32.mrf.mxu0
    %v2239 = vadd.f32 %v2060, %v2238
    %2240 = vmatmul.f32.gmra.mxu0 %v2032
    %v2241 = vpop.f32.mrf.mxu0
    %v2242 = vadd.f32 %v2060, %v2241
    %2243 = vmatmul.f32.gmra.mxu0 %v2033
    %v2244 = vpop.f32.mrf.mxu0
    %v2245 = vadd.f32 %v2060, %v2244
    %2246 = vmatmul.f32.gmra.mxu0 %v2034
    %v2247 = vpop.f32.mrf.mxu0
    %v2248 = vadd.f32 %v2060, %v2247
    %2249 = vmatmul.f32.gmra.mxu0 %v2035
    %v2250 = vpop.f32.mrf.mxu0
    %v2251 = vadd.f32 %v2060, %v2250
    %2252 = vmatmul.f32.gmra.mxu0 %v2036
    %v2253 = vpop.f32.mrf.mxu0
    %v2254 = vadd.f32 %v2060, %v2253
    %2255 = vmatmul.f32.gmra.mxu0 %v2037
    %v2256 = vpop.f32.mrf.mxu0
    %v2257 = vadd.f32 %v2060, %v2256
    %2258 = vmatmul.f32.gmra.mxu0 %v2038
    %v2259 = vpop.f32.mrf.mxu0
    %v2260 = vadd.f32 %v2060, %v2259
    %2261 = vmatmul.f32.gmra.mxu0 %v2039
    %v2262 = vpop.f32.mrf.mxu0
    %v2263 = vadd.f32 %v2060, %v2262
    %2264 = vmatmul.f32.gmra.mxu0 %v2040
    %v2265 = vpop.f32.mrf.mxu0
    %v2266 = vadd.f32 %v2060, %v2265
    %2267 = vmatmul.f32.gmra.mxu0 %v2041
    %v2268 = vpop.f32.mrf.mxu0
    %v2269 = vadd.f32 %v2060, %v2268
    %2270 = vdwg.mxu0
    %2271 = vst [vmem:[#allocation9] sm:$0xff] %v2080
    %2272 = vst [vmem:[#allocation9 + $0x8] sm:$0xff] %v2083
    %2273 = vst [vmem:[#allocation9 + $0x10] sm:$0xff] %v2086
    %2274 = vst [vmem:[#allocation9 + $0x18] sm:$0xff] %v2089
    %2275 = vst [vmem:[#allocation9 + $0x20] sm:$0xff] %v2092
    %2276 = vst [vmem:[#allocation9 + $0x28] sm:$0xff] %v2095
    %2277 = vst [vmem:[#allocation9 + $0x30] sm:$0xff] %v2098
    %2278 = vst [vmem:[#allocation9 + $0x38] sm:$0xff] %v2101
    %2279 = vst [vmem:[#allocation9 + $0x40] sm:$0xff] %v2104
    %2280 = vst [vmem:[#allocation9 + $0x48] sm:$0xff] %v2107
    %2281 = vst [vmem:[#allocation9 + $0x50] sm:$0xff] %v2110
    %2282 = vst [vmem:[#allocation9 + $0x58] sm:$0xff] %v2113
    %2283 = vst [vmem:[#allocation9 + $0x60] sm:$0xff] %v2116
    %2284 = vst [vmem:[#allocation9 + $0x68] sm:$0xff] %v2119
    %2285 = vst [vmem:[#allocation9 + $0x70] sm:$0xff] %v2122
    %2286 = vst [vmem:[#allocation9 + $0x78] sm:$0xff] %v2125
    %2287 = vst [vmem:[#allocation9 + $0x80] sm:$0xff] %v2128
    %2288 = vst [vmem:[#allocation9 + $0x88] sm:$0xff] %v2131
    %2289 = vst [vmem:[#allocation9 + $0x90] sm:$0xff] %v2134
    %2290 = vst [vmem:[#allocation9 + $0x98] sm:$0xff] %v2137
    %2291 = vst [vmem:[#allocation9 + $0xa0] sm:$0xff] %v2140
    %2292 = vst [vmem:[#allocation9 + $0xa8] sm:$0xff] %v2143
    %2293 = vst [vmem:[#allocation9 + $0xb0] sm:$0xff] %v2146
    %2294 = vst [vmem:[#allocation9 + $0xb8] sm:$0xff] %v2149
    %2295 = vst [vmem:[#allocation9 + $0xc0] sm:$0xff] %v2152
    %2296 = vst [vmem:[#allocation9 + $0xc8] sm:$0xff] %v2155
    %2297 = vst [vmem:[#allocation9 + $0xd0] sm:$0xff] %v2158
    %2298 = vst [vmem:[#allocation9 + $0xd8] sm:$0xff] %v2161
    %2299 = vst [vmem:[#allocation9 + $0xe0] sm:$0xff] %v2164
    %2300 = vst [vmem:[#allocation9 + $0xe8] sm:$0xff] %v2167
    %2301 = vst [vmem:[#allocation9 + $0xf0] sm:$0xff] %v2170
    %2302 = vst [vmem:[#allocation9 + $0xf8] sm:$0xff] %v2173
    %2303 = vst [vmem:[#allocation9 + $0x100] sm:$0xff] %v2176
    %2304 = vst [vmem:[#allocation9 + $0x108] sm:$0xff] %v2179
    %2305 = vst [vmem:[#allocation9 + $0x110] sm:$0xff] %v2182
    %2306 = vst [vmem:[#allocation9 + $0x118] sm:$0xff] %v2185
    %2307 = vst [vmem:[#allocation9 + $0x120] sm:$0xff] %v2188
    %2308 = vst [vmem:[#allocation9 + $0x128] sm:$0xff] %v2191
    %2309 = vst [vmem:[#allocation9 + $0x130] sm:$0xff] %v2194
    %2310 = vst [vmem:[#allocation9 + $0x138] sm:$0xff] %v2197
    %2311 = vst [vmem:[#allocation9 + $0x140] sm:$0xff] %v2200
    %2312 = vst [vmem:[#allocation9 + $0x148] sm:$0xff] %v2203
    %2313 = vst [vmem:[#allocation9 + $0x150] sm:$0xff] %v2206
    %2314 = vst [vmem:[#allocation9 + $0x158] sm:$0xff] %v2209
    %2315 = vst [vmem:[#allocation9 + $0x160] sm:$0xff] %v2212
    %2316 = vst [vmem:[#allocation9 + $0x168] sm:$0xff] %v2215
    %2317 = vst [vmem:[#allocation9 + $0x170] sm:$0xff] %v2218
    %2318 = vst [vmem:[#allocation9 + $0x178] sm:$0xff] %v2221
    %2319 = vst [vmem:[#allocation9 + $0x180] sm:$0xff] %v2224
    %2320 = vst [vmem:[#allocation9 + $0x188] sm:$0xff] %v2227
    %2321 = vst [vmem:[#allocation9 + $0x190] sm:$0xff] %v2230
    %2322 = vst [vmem:[#allocation9 + $0x198] sm:$0xff] %v2233
    %2323 = vst [vmem:[#allocation9 + $0x1a0] sm:$0xff] %v2236
    %2324 = vst [vmem:[#allocation9 + $0x1a8] sm:$0xff] %v2239
    %2325 = vst [vmem:[#allocation9 + $0x1b0] sm:$0xff] %v2242
    %2326 = vst [vmem:[#allocation9 + $0x1b8] sm:$0xff] %v2245
    %2327 = vst [vmem:[#allocation9 + $0x1c0] sm:$0xff] %v2248
    %2328 = vst [vmem:[#allocation9 + $0x1c8] sm:$0xff] %v2251
    %2329 = vst [vmem:[#allocation9 + $0x1d0] sm:$0xff] %v2254
    %2330 = vst [vmem:[#allocation9 + $0x1d8] sm:$0xff] %v2257
    %2331 = vst [vmem:[#allocation9 + $0x1e0] sm:$0xff] %v2260
    %2332 = vst [vmem:[#allocation9 + $0x1e8] sm:$0xff] %v2263
    %2333 = vst [vmem:[#allocation9 + $0x1f0] sm:$0xff] %v2266
    %2334 = vst [vmem:[#allocation9 + $0x1f8] sm:$0xff] %v2269
    // Predicated region
    $region30: #{tpu_custom_call.1} parent=1 // pred_check
      _
    $region31: #{tpu_custom_call.1} parent=1 // pred_check_branch
      %2336 = sbr.rel (0) target = $region33
    $region32: #{tpu_custom_call.1} parent=1 // pred_region
      %2338 = vsyncadd [#allocation5], 0
      %s2339 = sshll.u32 [#allocation9], 4
      %s2340 = int_to_ptr.vmem [resolvable:$true] %s2339
      %s2341 = sshll.u32 %s4, 4
      %s2342 = int_to_ptr.hbm [resolvable:$true] %s2341
      %2347 = dma.vmem_to_hbm [thread:$0]  %s2340, 8192, %s2342, [#allocation5], 128, 128, 8
    $region33: #{tpu_custom_call.1} parent=1 // pred_fallthru
      _
    // Predicated region
    $region34: #{tpu_custom_call.1} parent=1 // pred_check
      _
    $region35: #{tpu_custom_call.1} parent=1 // pred_check_branch
      %2349 = sbr.rel (0) target = $region37
    $region36: #{tpu_custom_call.1} parent=1 // pred_region
      %2351 = dma.done [#allocation5], 8192
    $region37: #{tpu_custom_call.1} parent=1 // pred_fallthru
      _
    %2352 = vsyncpa [#allocation4], 1
    %2353 = vsyncpa [#allocation7], 1
    %2354 = vsyncpa [#allocation5], 1

</llo_original>
